<compile_context>
chip_gen: v7x
topology: tpu7x:2x2x1
jax: 0.10.0
libtpu: 0.0.40
codegen_flags: <defaults>
</compile_context>

<pallas_src>
import math
from functools import partial

import jax
import jax.numpy as jnp
from jax.experimental import pallas as pl
from jax.experimental.pallas import tpu as pltpu

LN_EPS = 1e-6  # partial(nn.LayerNorm, eps=1e-06)


# ---------------------------------------------------------------- helpers ----
def _erf(x):
    # Abramowitz & Stegun 7.1.26 polynomial, |abs err| < 1.5e-7 (~f32 round-off).
    # TODO(synk): lax.erf has no Mosaic lowering rule; polynomial erf used instead.
    a1, a2, a3, a4, a5 = 0.254829592, -0.284496736, 1.421413741, -1.453152027, 1.061405429
    pp = 0.3275911
    sign = jnp.where(x >= 0.0, 1.0, -1.0)
    ax = jnp.abs(x)
    # reciprocal on the EUP slot (approx) instead of a VALU divide
    t = pl.reciprocal(1.0 + pp * ax, approx=True)
    poly = ((((a5 * t + a4) * t + a3) * t + a2) * t + a1) * t
    return sign * (1.0 - poly * jnp.exp(-ax * ax))


def _gelu_exact(x):
    # nn.GELU() default (erf-based, approximate='none')
    # TODO(synk): polynomial kept in f32; evaluate in bf16 on v6e/v7x if bundle
    # dumps show VALU as the saturating slot (v5e has no bf16 VPU).
    return 0.5 * x * (1.0 + _erf(x * (1.0 / math.sqrt(2.0))))


def _layernorm(x, w, b):
    mu = jnp.mean(x, axis=-1, keepdims=True)
    xc = x - mu
    var = jnp.mean(xc * xc, axis=-1, keepdims=True)
    return xc * jax.lax.rsqrt(var + LN_EPS) * w + b


# ----------------------------------------------------------------- kernel ----
def encoder_kernel(x_ref, pos_ref,
                   ln1w_ref, ln1b_ref, wqkv_ref, bqkv_ref, wo_ref, bo_ref,
                   ln2w_ref, ln2b_ref, w1_ref, b1_ref, w2_ref, b2_ref,
                   lnfw_ref, lnfb_ref, o_ref, *, num_heads):
    """Grid = (batch_tile, layer).  o_ref carries the activation across layers."""
    l = pl.program_id(1)
    n_layers = pl.num_programs(1)

    # ---- layer-0 prologue: x + pos_embedding (nn.Dropout == identity at inference)
    @pl.when(l == 0)
    def _():
        o_ref[...] = x_ref[...] + pos_ref[...]

    x = o_ref[...]                                   # carried activation (bb, S, D) f32
    bb, S, D = x.shape
    hd = D // num_heads

    # ---- ln_1 + multi-head self-attention (1/sqrt(hd) pre-folded into Q weights)
    h = _layernorm(x, ln1w_ref[0], ln1b_ref[0])
    h2 = h.reshape(bb * S, D).astype(jnp.bfloat16)
    qkv = jnp.dot(h2, wqkv_ref[0], preferred_element_type=jnp.float32) + bqkv_ref[0]

    # Head split: (bb*S, 3D) -> three (num_heads*bb, S, hd) operands (head-major
    # batch).  Only static lane slices + leading-axis concats (no 4-D transpose),
    # so each attention matmul below is ONE batched einsum over all heads
    # instead of `num_heads` tiny K=hd matmuls whose outputs stay live.
    def split_heads(base):
        return jnp.concatenate(
            [qkv[:, base + hh * hd: base + (hh + 1) * hd].reshape(bb, S, hd)
             for hh in range(num_heads)], axis=0)

    qh = split_heads(0 * D).astype(jnp.bfloat16)
    kh = split_heads(1 * D).astype(jnp.bfloat16)
    vh = split_heads(2 * D).astype(jnp.bfloat16)

    att = jnp.einsum('bqd,bkd->bqk', qh, kh,
                     preferred_element_type=jnp.float32)        # (H*bb, S, S) f32
    att = att - jnp.max(att, axis=-1, keepdims=True)
    p = jnp.exp(att)
    p = p * pl.reciprocal(jnp.sum(p, axis=-1, keepdims=True), approx=True)
    ctx = jnp.einsum('bqk,bkd->bqd', p.astype(jnp.bfloat16), vh,
                     preferred_element_type=jnp.float32)        # (H*bb, S, hd) f32

    # Head merge back to (bb*S, D) lanes, then one full-width out-projection.
    ctx = jnp.concatenate(
        [ctx[hh * bb:(hh + 1) * bb] for hh in range(num_heads)], axis=-1)
    ctx = ctx.reshape(bb * S, D).astype(jnp.bfloat16)
    attn = jnp.dot(ctx, wo_ref[0], preferred_element_type=jnp.float32) + bo_ref[0]
    x1 = x + attn.reshape(bb, S, D)                  # residual 1 (dropout = identity)

    # ---- ln_2 + MLP (Linear -> GELU -> Linear), residual 2 ----
    y = _layernorm(x1, ln2w_ref[0], ln2b_ref[0]).reshape(bb * S, D).astype(jnp.bfloat16)
    hmid = jnp.dot(y, w1_ref[0], preferred_element_type=jnp.float32) + b1_ref[0]
    hmid = _gelu_exact(hmid).astype(jnp.bfloat16)
    y2 = jnp.dot(hmid, w2_ref[0], preferred_element_type=jnp.float32) + b2_ref[0]
    out = x1 + y2.reshape(bb, S, D)

    # Exactly one store per step: intermediate layers store the layer output,
    # the last layer stores only the encoder-level LayerNorm result.
    @pl.when(l < n_layers - 1)
    def _():
        o_ref[...] = out

    @pl.when(l == n_layers - 1)
    def _():
        o_ref[...] = _layernorm(out, lnfw_ref[...], lnfb_ref[...])


# --------------------------------------------------------------- wrappers ----
_LAYER_WEIGHT_NAMES = ('ln1_w', 'ln1_b', 'wqkv_t', 'bqkv', 'wo_t', 'bo',
                       'ln2_w', 'ln2_b', 'w1_t', 'b1', 'w2_t', 'b2')


def _vmem_budget_bytes():
    """Generation-aware VMEM budget: ~80% of physical per-core VMEM
    (64 MiB on v7x, 128 MiB on v5e/v6e)."""
    try:
        cap = int(pltpu.get_tpu_info().vmem_capacity_bytes)
    except Exception:            # conservative fallback if query unavailable
        cap = 64 << 20
    return int(0.8 * cap)


def _estimate_vmem_bytes(bb, S, D, M, H, staged):
    """Rough per-step VMEM footprint for batch tile `bb`: double-buffered
    pipeline blocks plus the kernel's large temporaries."""
    f32 = 4
    act = bb * S * D * f32
    total = 2 * act + 2 * act + 2 * S * D * f32           # x in, carried out, pos
    for name in _LAYER_WEIGHT_NAMES:
        a = staged[name]
        total += 2 * math.prod(a.shape[1:]) * a.dtype.itemsize
    total += 4 * D * f32                                   # final LN scale / bias
    # temporaries: ln1 output, qkv (f32 + bf16 head splits), scores + probs,
    # ctx (f32 + bf16 + merged), MLP hidden (f32 + bf16), residual slack.
    total += act
    total += bb * S * 3 * D * (4 + 2)
    total += 2 * bb * H * S * S * 4
    total += bb * S * D * (4 + 2 + 2)
    total += bb * S * M * (4 + 2)
    total += 3 * act
    return total


def _pick_batch_tile(B, S, D, M, H, staged, budget):
    """Largest divisor of B whose estimated footprint fits the VMEM budget.
    Bigger tiles cut weight HBM traffic ((B/bb)*L*W_layer) and amortize the
    per-grid-step overhead."""
    bb = 1
    for cand in range(1, B + 1):
        if B % cand == 0 and _estimate_vmem_bytes(cand, S, D, M, H, staged) <= budget:
            bb = cand
    return bb


def encoder_forward(x, staged, *, num_heads, batch_tile=None):
    B, S, D = x.shape
    M = staged['w1_t'].shape[-1]
    L = staged['wqkv_t'].shape[0]

    vmem_budget = _vmem_budget_bytes()
    if batch_tile is None:
        batch_tile = _pick_batch_tile(B, S, D, M, num_heads, staged, vmem_budget)
    bb = batch_tile
    assert B % bb == 0, "batch_tile must divide batch"
    grid = (B // bb, L)

    act_map = lambda b, l: (b, 0, 0)        # noqa: E731
    const3 = lambda b, l: (0, 0, 0)         # noqa: E731
    const2 = lambda b, l: (0, 0)            # noqa: E731
    layer3 = lambda b, l: (l, 0, 0)         # noqa: E731

    in_args = [x, staged['pos_embedding']]
    in_specs = [pl.BlockSpec((bb, S, D), act_map),
                pl.BlockSpec((1, S, D), const3)]
    for name in _LAYER_WEIGHT_NAMES:
        a = staged[name]
        in_args.append(a)
        # TODO(synk): if weight DMA is exposed on v5e at the chosen batch_tile,
        # add pipeline_mode=pl.Buffered(3) to these weight specs (skip on v7x).
        in_specs.append(pl.BlockSpec((1,) + tuple(a.shape[1:]), layer3))
    in_args += [staged['ln_w'], staged['ln_b']]
    in_specs += [pl.BlockSpec(tuple(staged['ln_w'].shape), const2),
                 pl.BlockSpec(tuple(staged['ln_b'].shape), const2)]

    out_spec = pl.BlockSpec((bb, S, D), act_map)

    # NOTE: an attention/MLP sub-step split (grid=(B//bb, 2L)) was evaluated for
    # v7x, but under BlockSpec auto-pipelining every weight input keeps its own
    # double buffer regardless of which sub-step uses it, so it does not shrink
    # the resident set; realizing that win needs manual DMA (P4).
    # TODO(synk): on v7x, switch grid axis 0 to pltpu.CORE_PARALLEL if profiling
    # shows single-TensorCore occupancy (ensure B // batch_tile >= 2).
    return pl.pallas_call(
        partial(encoder_kernel, num_heads=num_heads),
        grid=grid,
        in_specs=in_specs,
        out_specs=out_spec,
        out_shape=jax.ShapeDtypeStruct((B, S, D), jnp.float32),
        compiler_params=pltpu.CompilerParams(
            dimension_semantics=("parallel", "arbitrary"),
            vmem_limit_bytes=vmem_budget),
    )(*in_args)


# ------------------------------------------------------------------ params ----
def init_params(key, num_layers, seq_length, hidden_dim, mlp_dim):
    """Raw f32 params, PyTorch-equivalent (Linear weights stored as W.T)."""
    keys = jax.random.split(key, 1 + num_layers)
    params = {
        'pos_embedding': 0.02 * jax.random.normal(
            keys[0], (1, seq_length, hidden_dim), jnp.float32),
        'ln_w': jnp.ones((1, hidden_dim), jnp.float32),
        'ln_b': jnp.zeros((1, hidden_dim), jnp.float32),
        'layers': [],
    }
    D, M = hidden_dim, mlp_dim
    for i in range(num_layers):
        k = jax.random.split(keys[1 + i], 4)
        params['layers'].append({
            'ln1_w': jnp.ones((1, D), jnp.float32),
            'ln1_b': jnp.zeros((1, D), jnp.float32),
            # W.T of PyTorch in_proj_weight (3D, D) -> (D, 3D)
            'wqkv_t': 0.02 * jax.random.normal(k[0], (D, 3 * D), jnp.float32),
            'bqkv': jnp.zeros((1, 3 * D), jnp.float32),
            'wo_t': 0.02 * jax.random.normal(k[1], (D, D), jnp.float32),
            'bo': jnp.zeros((1, D), jnp.float32),
            'ln2_w': jnp.ones((1, D), jnp.float32),
            'ln2_b': jnp.zeros((1, D), jnp.float32),
            'w1_t': 0.02 * jax.random.normal(k[2], (D, M), jnp.float32),
            'b1': jnp.zeros((1, M), jnp.float32),
            'w2_t': 0.02 * jax.random.normal(k[3], (M, D), jnp.float32),
            'b2': jnp.zeros((1, D), jnp.float32),
        })
    return params


def stage_params(raw, num_heads):
    """Stack layers to (L, ...), fold 1/sqrt(hd) into Q proj, cast matmul weights to bf16."""
    D = raw['layers'][0]['wqkv_t'].shape[0]
    hd = D // num_heads
    scale = 1.0 / math.sqrt(hd)

    def stack(name):
        return jnp.stack([layer[name] for layer in raw['layers']], axis=0)

    wqkv = stack('wqkv_t')                              # (L, D, 3D)
    bqkv = stack('bqkv')                                # (L, 1, 3D)
    wqkv = wqkv.at[:, :, :D].multiply(scale)            # fold attention scale into Q
    bqkv = bqkv.at[:, :, :D].multiply(scale)

    return {
        'pos_embedding': raw['pos_embedding'].astype(jnp.float32),
        'ln_w': raw['ln_w'].astype(jnp.float32),
        'ln_b': raw['ln_b'].astype(jnp.float32),
        'ln1_w': stack('ln1_w'), 'ln1_b': stack('ln1_b'),
        'wqkv_t': wqkv.astype(jnp.bfloat16), 'bqkv': bqkv.astype(jnp.float32),
        'wo_t': stack('wo_t').astype(jnp.bfloat16), 'bo': stack('bo'),
        'ln2_w': stack('ln2_w'), 'ln2_b': stack('ln2_b'),
        'w1_t': stack('w1_t').astype(jnp.bfloat16), 'b1': stack('b1'),
        'w2_t': stack('w2_t').astype(jnp.bfloat16), 'b2': stack('b2'),
    }


if __name__ == "__main__":
    # Encoder(seq_length=8, num_layers=2, num_heads=4, hidden_dim=32,
    #         mlp_dim=64, dropout=0.0, attention_dropout=0.0)
    # TODO(synk): training-mode nn.Dropout not implemented (identity / p=0 here)
    B, S, D, H, M, L = 2, 8, 32, 4, 64, 2
    key = jax.random.PRNGKey(0)
    kx, kp = jax.random.split(key)
    x = jax.random.normal(kx, (B, S, D), jnp.float32)
    raw = init_params(kp, L, S, D, M)
    staged = stage_params(raw, H)

    fwd = jax.jit(partial(encoder_forward, num_heads=H))   # batch_tile auto-sized
    out = fwd(x, staged)
    jax.block_until_ready(out)
    assert out.shape == (B, S, D) and out.dtype == jnp.float32
    assert bool(jnp.all(jnp.isfinite(out)))
    print("KERNEL_OK")
</pallas_src>

<mosaic_0001>
module attributes {stable_mosaic.version = 11 : i64} {
  func.func @encoder_kernel(%arg0: i32, %arg1: i32, %arg2: memref<2x8x32xf32, #tpu.memory_space<vmem>>, %arg3: memref<1x8x32xf32, #tpu.memory_space<vmem>>, %arg4: memref<1x1x32xf32, #tpu.memory_space<vmem>>, %arg5: memref<1x1x32xf32, #tpu.memory_space<vmem>>, %arg6: memref<1x32x96xbf16, #tpu.memory_space<vmem>>, %arg7: memref<1x1x96xf32, #tpu.memory_space<vmem>>, %arg8: memref<1x32x32xbf16, #tpu.memory_space<vmem>>, %arg9: memref<1x1x32xf32, #tpu.memory_space<vmem>>, %arg10: memref<1x1x32xf32, #tpu.memory_space<vmem>>, %arg11: memref<1x1x32xf32, #tpu.memory_space<vmem>>, %arg12: memref<1x32x64xbf16, #tpu.memory_space<vmem>>, %arg13: memref<1x1x64xf32, #tpu.memory_space<vmem>>, %arg14: memref<1x64x32xbf16, #tpu.memory_space<vmem>>, %arg15: memref<1x1x32xf32, #tpu.memory_space<vmem>>, %arg16: memref<1x32xf32, #tpu.memory_space<vmem>>, %arg17: memref<1x32xf32, #tpu.memory_space<vmem>>, %arg18: memref<2x8x32xf32, #tpu.memory_space<vmem>>) attributes {dimension_semantics = [#tpu.dimension_semantics<parallel>, #tpu.dimension_semantics<arbitrary>], iteration_bounds = array<i64: 1, 2>, scalar_prefetch = 0 : i64, scratch_operands = 0 : i64, tpu.core_type = #tpu.core_type<tc>, window_params = [{transform_indices = @transform_0, window_bounds = array<i64: 2, 8, 32>}, {pipeline_mode = #tpu.pipeline_mode<synchronous>, transform_indices = @transform_1, window_bounds = array<i64: 1, 8, 32>}, {transform_indices = @transform_2, window_bounds = array<i64: 1, 1, 32>}, {transform_indices = @transform_3, window_bounds = array<i64: 1, 1, 32>}, {transform_indices = @transform_4, window_bounds = array<i64: 1, 32, 96>}, {transform_indices = @transform_5, window_bounds = array<i64: 1, 1, 96>}, {transform_indices = @transform_6, window_bounds = array<i64: 1, 32, 32>}, {transform_indices = @transform_7, window_bounds = array<i64: 1, 1, 32>}, {transform_indices = @transform_8, window_bounds = array<i64: 1, 1, 32>}, {transform_indices = @transform_9, window_bounds = array<i64: 1, 1, 32>}, {transform_indices = @transform_10, window_bounds = array<i64: 1, 32, 64>}, {transform_indices = @transform_11, window_bounds = array<i64: 1, 1, 64>}, {transform_indices = @transform_12, window_bounds = array<i64: 1, 64, 32>}, {transform_indices = @transform_13, window_bounds = array<i64: 1, 1, 32>}, {pipeline_mode = #tpu.pipeline_mode<synchronous>, transform_indices = @transform_14, window_bounds = array<i64: 1, 32>}, {pipeline_mode = #tpu.pipeline_mode<synchronous>, transform_indices = @transform_15, window_bounds = array<i64: 1, 32>}, {transform_indices = @transform_16, window_bounds = array<i64: 2, 8, 32>}]} {
    %c0_i32 = arith.constant 0 : i32
    %0 = arith.cmpi eq, %arg1, %c0_i32 : i32
    %1 = arith.extui %0 : i1 to i32
    %c0_i32_0 = arith.constant 0 : i32
    %2 = arith.cmpi ne, %1, %c0_i32_0 : i32
    scf.if %2 {
      %c0_74 = arith.constant 0 : index
      %c0_75 = arith.constant 0 : index
      %c0_76 = arith.constant 0 : index
      %189 = vector.load %arg2[%c0_74, %c0_75, %c0_76] : memref<2x8x32xf32, #tpu.memory_space<vmem>>, vector<2x8x32xf32>
      %c0_77 = arith.constant 0 : index
      %c0_78 = arith.constant 0 : index
      %c0_79 = arith.constant 0 : index
      %190 = vector.load %arg3[%c0_77, %c0_78, %c0_79] : memref<1x8x32xf32, #tpu.memory_space<vmem>>, vector<1x8x32xf32>
      %191 = vector.broadcast %190 : vector<1x8x32xf32> to vector<2x8x32xf32>
      %192 = arith.addf %189, %191 : vector<2x8x32xf32>
      %c0_80 = arith.constant 0 : index
      %c0_81 = arith.constant 0 : index
      %c0_82 = arith.constant 0 : index
      %193 = vector.load %arg18[%c0_80, %c0_81, %c0_82] : memref<2x8x32xf32, #tpu.memory_space<vmem>>, vector<2x8x32xf32>
      tpu.vector_store %arg18[%c0_80, %c0_81, %c0_82], %192 {strides = array<i32>} : memref<2x8x32xf32, #tpu.memory_space<vmem>>, vector<2x8x32xf32>,
    } else {
    }
    %c0 = arith.constant 0 : index
    %c0_1 = arith.constant 0 : index
    %c0_2 = arith.constant 0 : index
    %3 = vector.load %arg18[%c0, %c0_1, %c0_2] : memref<2x8x32xf32, #tpu.memory_space<vmem>>, vector<2x8x32xf32>
    %c0_3 = arith.constant 0 : index
    %c0_4 = arith.constant 0 : index
    %c0_5 = arith.constant 0 : index
    %4 = vector.load %arg4[%c0_3, %c0_4, %c0_5] : memref<1x1x32xf32, #tpu.memory_space<vmem>>, vector<1x1x32xf32>
    %5 = vector.shape_cast %4 : vector<1x1x32xf32> to vector<1x32xf32>
    %c0_6 = arith.constant 0 : index
    %c0_7 = arith.constant 0 : index
    %c0_8 = arith.constant 0 : index
    %6 = vector.load %arg5[%c0_6, %c0_7, %c0_8] : memref<1x1x32xf32, #tpu.memory_space<vmem>>, vector<1x1x32xf32>
    %7 = vector.shape_cast %6 : vector<1x1x32xf32> to vector<1x32xf32>
    %cst = arith.constant dense<0.000000e+00> : vector<2x8xf32>
    %8 = vector.multi_reduction <add>, %3, %cst [2] : vector<2x8x32xf32> to vector<2x8xf32>
    %9 = vector.shape_cast %8 : vector<2x8xf32> to vector<2x8x1xf32>
    %cst_9 = arith.constant 3.200000e+01 : f32
    %10 = vector.broadcast %cst_9 : f32 to vector<2x8x1xf32>
    %11 = arith.divf %9, %10 : vector<2x8x1xf32>
    %12 = vector.broadcast %11 : vector<2x8x1xf32> to vector<2x8x32xf32>
    %13 = arith.subf %3, %12 : vector<2x8x32xf32>
    %14 = arith.mulf %13, %13 : vector<2x8x32xf32>
    %cst_10 = arith.constant dense<0.000000e+00> : vector<2x8xf32>
    %15 = vector.multi_reduction <add>, %14, %cst_10 [2] : vector<2x8x32xf32> to vector<2x8xf32>
    %16 = vector.shape_cast %15 : vector<2x8xf32> to vector<2x8x1xf32>
    %cst_11 = arith.constant 3.200000e+01 : f32
    %17 = vector.broadcast %cst_11 : f32 to vector<2x8x1xf32>
    %18 = arith.divf %16, %17 : vector<2x8x1xf32>
    %cst_12 = arith.constant 9.99999997E-7 : f32
    %19 = vector.broadcast %cst_12 : f32 to vector<2x8x1xf32>
    %20 = arith.addf %18, %19 : vector<2x8x1xf32>
    %21 = math.rsqrt %20 : vector<2x8x1xf32>
    %22 = vector.broadcast %21 : vector<2x8x1xf32> to vector<2x8x32xf32>
    %23 = arith.mulf %13, %22 : vector<2x8x32xf32>
    %24 = vector.shape_cast %5 : vector<1x32xf32> to vector<1x1x32xf32>
    %25 = vector.broadcast %24 : vector<1x1x32xf32> to vector<2x8x32xf32>
    %26 = arith.mulf %23, %25 : vector<2x8x32xf32>
    %27 = vector.shape_cast %7 : vector<1x32xf32> to vector<1x1x32xf32>
    %28 = vector.broadcast %27 : vector<1x1x32xf32> to vector<2x8x32xf32>
    %29 = arith.addf %26, %28 : vector<2x8x32xf32>
    %30 = vector.shape_cast %29 : vector<2x8x32xf32> to vector<16x32xf32>
    %31 = arith.truncf %30 : vector<16x32xf32> to vector<16x32xbf16>
    %c0_13 = arith.constant 0 : index
    %c0_14 = arith.constant 0 : index
    %c0_15 = arith.constant 0 : index
    %32 = vector.load %arg6[%c0_13, %c0_14, %c0_15] : memref<1x32x96xbf16, #tpu.memory_space<vmem>>, vector<1x32x96xbf16>
    %33 = vector.shape_cast %32 : vector<1x32x96xbf16> to vector<32x96xbf16>
    %cst_16 = arith.constant dense<0.000000e+00> : vector<16x96xf32>
    %34 = tpu.matmul %31, %33, %cst_16 {dimension_numbers = #tpu.dot_dimension_numbers<[1], [0], [0], [1], [0, 0, 1, 1], [], []>} : vector<16x32xbf16>, vector<32x96xbf16>, vector<16x96xf32> -> vector<16x96xf32>
    %c0_17 = arith.constant 0 : index
    %c0_18 = arith.constant 0 : index
    %c0_19 = arith.constant 0 : index
    %35 = vector.load %arg7[%c0_17, %c0_18, %c0_19] : memref<1x1x96xf32, #tpu.memory_space<vmem>>, vector<1x1x96xf32>
    %36 = vector.shape_cast %35 : vector<1x1x96xf32> to vector<1x96xf32>
    %37 = vector.broadcast %36 : vector<1x96xf32> to vector<16x96xf32>
    %38 = arith.addf %34, %37 : vector<16x96xf32>
    %39 = vector.extract_strided_slice %38 {offsets = [0, 0], sizes = [16, 8], strides = [1, 1]} : vector<16x96xf32> to vector<16x8xf32>
    %40 = vector.shape_cast %39 : vector<16x8xf32> to vector<2x8x8xf32>
    %41 = vector.extract_strided_slice %38 {offsets = [0, 8], sizes = [16, 8], strides = [1, 1]} : vector<16x96xf32> to vector<16x8xf32>
    %42 = vector.shape_cast %41 : vector<16x8xf32> to vector<2x8x8xf32>
    %43 = vector.extract_strided_slice %38 {offsets = [0, 16], sizes = [16, 8], strides = [1, 1]} : vector<16x96xf32> to vector<16x8xf32>
    %44 = vector.shape_cast %43 : vector<16x8xf32> to vector<2x8x8xf32>
    %45 = vector.extract_strided_slice %38 {offsets = [0, 24], sizes = [16, 8], strides = [1, 1]} : vector<16x96xf32> to vector<16x8xf32>
    %46 = vector.shape_cast %45 : vector<16x8xf32> to vector<2x8x8xf32>
    %47 = tpu.concatenate %40, %42, %44, %46 in 0 : vector<2x8x8xf32>, vector<2x8x8xf32>, vector<2x8x8xf32>, vector<2x8x8xf32> -> vector<8x8x8xf32>
    %48 = arith.truncf %47 : vector<8x8x8xf32> to vector<8x8x8xbf16>
    %49 = vector.extract_strided_slice %38 {offsets = [0, 32], sizes = [16, 8], strides = [1, 1]} : vector<16x96xf32> to vector<16x8xf32>
    %50 = vector.shape_cast %49 : vector<16x8xf32> to vector<2x8x8xf32>
    %51 = vector.extract_strided_slice %38 {offsets = [0, 40], sizes = [16, 8], strides = [1, 1]} : vector<16x96xf32> to vector<16x8xf32>
    %52 = vector.shape_cast %51 : vector<16x8xf32> to vector<2x8x8xf32>
    %53 = vector.extract_strided_slice %38 {offsets = [0, 48], sizes = [16, 8], strides = [1, 1]} : vector<16x96xf32> to vector<16x8xf32>
    %54 = vector.shape_cast %53 : vector<16x8xf32> to vector<2x8x8xf32>
    %55 = vector.extract_strided_slice %38 {offsets = [0, 56], sizes = [16, 8], strides = [1, 1]} : vector<16x96xf32> to vector<16x8xf32>
    %56 = vector.shape_cast %55 : vector<16x8xf32> to vector<2x8x8xf32>
    %57 = tpu.concatenate %50, %52, %54, %56 in 0 : vector<2x8x8xf32>, vector<2x8x8xf32>, vector<2x8x8xf32>, vector<2x8x8xf32> -> vector<8x8x8xf32>
    %58 = arith.truncf %57 : vector<8x8x8xf32> to vector<8x8x8xbf16>
    %59 = vector.extract_strided_slice %38 {offsets = [0, 64], sizes = [16, 8], strides = [1, 1]} : vector<16x96xf32> to vector<16x8xf32>
    %60 = vector.shape_cast %59 : vector<16x8xf32> to vector<2x8x8xf32>
    %61 = vector.extract_strided_slice %38 {offsets = [0, 72], sizes = [16, 8], strides = [1, 1]} : vector<16x96xf32> to vector<16x8xf32>
    %62 = vector.shape_cast %61 : vector<16x8xf32> to vector<2x8x8xf32>
    %63 = vector.extract_strided_slice %38 {offsets = [0, 80], sizes = [16, 8], strides = [1, 1]} : vector<16x96xf32> to vector<16x8xf32>
    %64 = vector.shape_cast %63 : vector<16x8xf32> to vector<2x8x8xf32>
    %65 = vector.extract_strided_slice %38 {offsets = [0, 88], sizes = [16, 8], strides = [1, 1]} : vector<16x96xf32> to vector<16x8xf32>
    %66 = vector.shape_cast %65 : vector<16x8xf32> to vector<2x8x8xf32>
    %67 = tpu.concatenate %60, %62, %64, %66 in 0 : vector<2x8x8xf32>, vector<2x8x8xf32>, vector<2x8x8xf32>, vector<2x8x8xf32> -> vector<8x8x8xf32>
    %68 = arith.truncf %67 : vector<8x8x8xf32> to vector<8x8x8xbf16>
    "tpu.trace_start"() <{level = 10 : i32, message = "bqd,bkd->bqk"}> : () -> ()
    %cst_20 = arith.constant dense<0.000000e+00> : vector<8x8x8xf32>
    %69 = tpu.matmul %48, %58, %cst_20 {dimension_numbers = #tpu.dot_dimension_numbers<[2], [2], [1], [1], [0, 0, 0, 1, 1, 1], [0], [0]>} : vector<8x8x8xbf16>, vector<8x8x8xbf16>, vector<8x8x8xf32> -> vector<8x8x8xf32>
    "tpu.trace_stop"() : () -> ()
    %cst_21 = arith.constant dense<0xFF800000> : vector<8x8xf32>
    %70 = vector.multi_reduction <maximumf>, %69, %cst_21 [2] : vector<8x8x8xf32> to vector<8x8xf32>
    %71 = vector.shape_cast %70 : vector<8x8xf32> to vector<8x8x1xf32>
    %72 = vector.broadcast %71 : vector<8x8x1xf32> to vector<8x8x8xf32>
    %73 = arith.subf %69, %72 : vector<8x8x8xf32>
    %74 = math.exp %73 : vector<8x8x8xf32>
    %cst_22 = arith.constant dense<0.000000e+00> : vector<8x8xf32>
    %75 = vector.multi_reduction <add>, %74, %cst_22 [2] : vector<8x8x8xf32> to vector<8x8xf32>
    %76 = vector.shape_cast %75 : vector<8x8xf32> to vector<8x8x1xf32>
    %77 = tpu.reciprocal %76 {approx = true} : vector<8x8x1xf32> -> vector<8x8x1xf32>
    %78 = vector.broadcast %77 : vector<8x8x1xf32> to vector<8x8x8xf32>
    %79 = arith.mulf %74, %78 : vector<8x8x8xf32>
    %80 = arith.truncf %79 : vector<8x8x8xf32> to vector<8x8x8xbf16>
    "tpu.trace_start"() <{level = 10 : i32, message = "bqk,bkd->bqd"}> : () -> ()
    %cst_23 = arith.constant dense<0.000000e+00> : vector<8x8x8xf32>
    %81 = tpu.matmul %80, %68, %cst_23 {dimension_numbers = #tpu.dot_dimension_numbers<[2], [1], [1], [2], [0, 0, 0, 1, 1, 2], [0], [0]>} : vector<8x8x8xbf16>, vector<8x8x8xbf16>, vector<8x8x8xf32> -> vector<8x8x8xf32>
    "tpu.trace_stop"() : () -> ()
    %82 = vector.extract_strided_slice %81 {offsets = [0, 0, 0], sizes = [2, 8, 8], strides = [1, 1, 1]} : vector<8x8x8xf32> to vector<2x8x8xf32>
    %83 = vector.extract_strided_slice %81 {offsets = [2, 0, 0], sizes = [2, 8, 8], strides = [1, 1, 1]} : vector<8x8x8xf32> to vector<2x8x8xf32>
    %84 = vector.extract_strided_slice %81 {offsets = [4, 0, 0], sizes = [2, 8, 8], strides = [1, 1, 1]} : vector<8x8x8xf32> to vector<2x8x8xf32>
    %85 = vector.extract_strided_slice %81 {offsets = [6, 0, 0], sizes = [2, 8, 8], strides = [1, 1, 1]} : vector<8x8x8xf32> to vector<2x8x8xf32>
    %86 = tpu.concatenate %82, %83, %84, %85 in 2 : vector<2x8x8xf32>, vector<2x8x8xf32>, vector<2x8x8xf32>, vector<2x8x8xf32> -> vector<2x8x32xf32>
    %87 = vector.shape_cast %86 : vector<2x8x32xf32> to vector<16x32xf32>
    %88 = arith.truncf %87 : vector<16x32xf32> to vector<16x32xbf16>
    %c0_24 = arith.constant 0 : index
    %c0_25 = arith.constant 0 : index
    %c0_26 = arith.constant 0 : index
    %89 = vector.load %arg8[%c0_24, %c0_25, %c0_26] : memref<1x32x32xbf16, #tpu.memory_space<vmem>>, vector<1x32x32xbf16>
    %90 = vector.shape_cast %89 : vector<1x32x32xbf16> to vector<32x32xbf16>
    %cst_27 = arith.constant dense<0.000000e+00> : vector<16x32xf32>
    %91 = tpu.matmul %88, %90, %cst_27 {dimension_numbers = #tpu.dot_dimension_numbers<[1], [0], [0], [1], [0, 0, 1, 1], [], []>} : vector<16x32xbf16>, vector<32x32xbf16>, vector<16x32xf32> -> vector<16x32xf32>
    %c0_28 = arith.constant 0 : index
    %c0_29 = arith.constant 0 : index
    %c0_30 = arith.constant 0 : index
    %92 = vector.load %arg9[%c0_28, %c0_29, %c0_30] : memref<1x1x32xf32, #tpu.memory_space<vmem>>, vector<1x1x32xf32>
    %93 = vector.shape_cast %92 : vector<1x1x32xf32> to vector<1x32xf32>
    %94 = vector.broadcast %93 : vector<1x32xf32> to vector<16x32xf32>
    %95 = arith.addf %91, %94 : vector<16x32xf32>
    %96 = vector.shape_cast %95 : vector<16x32xf32> to vector<2x8x32xf32>
    %97 = arith.addf %3, %96 : vector<2x8x32xf32>
    %c0_31 = arith.constant 0 : index
    %c0_32 = arith.constant 0 : index
    %c0_33 = arith.constant 0 : index
    %98 = vector.load %arg10[%c0_31, %c0_32, %c0_33] : memref<1x1x32xf32, #tpu.memory_space<vmem>>, vector<1x1x32xf32>
    %99 = vector.shape_cast %98 : vector<1x1x32xf32> to vector<1x32xf32>
    %c0_34 = arith.constant 0 : index
    %c0_35 = arith.constant 0 : index
    %c0_36 = arith.constant 0 : index
    %100 = vector.load %arg11[%c0_34, %c0_35, %c0_36] : memref<1x1x32xf32, #tpu.memory_space<vmem>>, vector<1x1x32xf32>
    %101 = vector.shape_cast %100 : vector<1x1x32xf32> to vector<1x32xf32>
    %cst_37 = arith.constant dense<0.000000e+00> : vector<2x8xf32>
    %102 = vector.multi_reduction <add>, %97, %cst_37 [2] : vector<2x8x32xf32> to vector<2x8xf32>
    %103 = vector.shape_cast %102 : vector<2x8xf32> to vector<2x8x1xf32>
    %cst_38 = arith.constant 3.200000e+01 : f32
    %104 = vector.broadcast %cst_38 : f32 to vector<2x8x1xf32>
    %105 = arith.divf %103, %104 : vector<2x8x1xf32>
    %106 = vector.broadcast %105 : vector<2x8x1xf32> to vector<2x8x32xf32>
    %107 = arith.subf %97, %106 : vector<2x8x32xf32>
    %108 = arith.mulf %107, %107 : vector<2x8x32xf32>
    %cst_39 = arith.constant dense<0.000000e+00> : vector<2x8xf32>
    %109 = vector.multi_reduction <add>, %108, %cst_39 [2] : vector<2x8x32xf32> to vector<2x8xf32>
    %110 = vector.shape_cast %109 : vector<2x8xf32> to vector<2x8x1xf32>
    %cst_40 = arith.constant 3.200000e+01 : f32
    %111 = vector.broadcast %cst_40 : f32 to vector<2x8x1xf32>
    %112 = arith.divf %110, %111 : vector<2x8x1xf32>
    %cst_41 = arith.constant 9.99999997E-7 : f32
    %113 = vector.broadcast %cst_41 : f32 to vector<2x8x1xf32>
    %114 = arith.addf %112, %113 : vector<2x8x1xf32>
    %115 = math.rsqrt %114 : vector<2x8x1xf32>
    %116 = vector.broadcast %115 : vector<2x8x1xf32> to vector<2x8x32xf32>
    %117 = arith.mulf %107, %116 : vector<2x8x32xf32>
    %118 = vector.shape_cast %99 : vector<1x32xf32> to vector<1x1x32xf32>
    %119 = vector.broadcast %118 : vector<1x1x32xf32> to vector<2x8x32xf32>
    %120 = arith.mulf %117, %119 : vector<2x8x32xf32>
    %121 = vector.shape_cast %101 : vector<1x32xf32> to vector<1x1x32xf32>
    %122 = vector.broadcast %121 : vector<1x1x32xf32> to vector<2x8x32xf32>
    %123 = arith.addf %120, %122 : vector<2x8x32xf32>
    %124 = vector.shape_cast %123 : vector<2x8x32xf32> to vector<16x32xf32>
    %125 = arith.truncf %124 : vector<16x32xf32> to vector<16x32xbf16>
    %c0_42 = arith.constant 0 : index
    %c0_43 = arith.constant 0 : index
    %c0_44 = arith.constant 0 : index
    %126 = vector.load %arg12[%c0_42, %c0_43, %c0_44] : memref<1x32x64xbf16, #tpu.memory_space<vmem>>, vector<1x32x64xbf16>
    %127 = vector.shape_cast %126 : vector<1x32x64xbf16> to vector<32x64xbf16>
    %cst_45 = arith.constant dense<0.000000e+00> : vector<16x64xf32>
    %128 = tpu.matmul %125, %127, %cst_45 {dimension_numbers = #tpu.dot_dimension_numbers<[1], [0], [0], [1], [0, 0, 1, 1], [], []>} : vector<16x32xbf16>, vector<32x64xbf16>, vector<16x64xf32> -> vector<16x64xf32>
    %c0_46 = arith.constant 0 : index
    %c0_47 = arith.constant 0 : index
    %c0_48 = arith.constant 0 : index
    %129 = vector.load %arg13[%c0_46, %c0_47, %c0_48] : memref<1x1x64xf32, #tpu.memory_space<vmem>>, vector<1x1x64xf32>
    %130 = vector.shape_cast %129 : vector<1x1x64xf32> to vector<1x64xf32>
    %131 = vector.broadcast %130 : vector<1x64xf32> to vector<16x64xf32>
    %132 = arith.addf %128, %131 : vector<16x64xf32>
    %cst_49 = arith.constant 5.000000e-01 : f32
    %133 = vector.broadcast %cst_49 : f32 to vector<16x64xf32>
    %134 = arith.mulf %133, %132 : vector<16x64xf32>
    %cst_50 = arith.constant 0.707106769 : f32
    %135 = vector.broadcast %cst_50 : f32 to vector<16x64xf32>
    %136 = arith.mulf %132, %135 : vector<16x64xf32>
    %cst_51 = arith.constant 0.000000e+00 : f32
    %137 = vector.broadcast %cst_51 : f32 to vector<16x64xf32>
    %138 = arith.cmpf oge, %136, %137 : vector<16x64xf32>
    %cst_52 = arith.constant 1.000000e+00 : f32
    %cst_53 = arith.constant -1.000000e+00 : f32
    %139 = vector.broadcast %cst_52 : f32 to vector<16x64xf32>
    %140 = vector.broadcast %cst_53 : f32 to vector<16x64xf32>
    %141 = arith.select %138, %139, %140 : vector<16x64xi1>, vector<16x64xf32>
    %142 = math.absf %136 : vector<16x64xf32>
    %cst_54 = arith.constant 0.327591091 : f32
    %143 = vector.broadcast %cst_54 : f32 to vector<16x64xf32>
    %144 = arith.mulf %143, %142 : vector<16x64xf32>
    %cst_55 = arith.constant 1.000000e+00 : f32
    %145 = vector.broadcast %cst_55 : f32 to vector<16x64xf32>
    %146 = arith.addf %145, %144 : vector<16x64xf32>
    %147 = tpu.reciprocal %146 {approx = true} : vector<16x64xf32> -> vector<16x64xf32>
    %cst_56 = arith.constant 1.06140542 : f32
    %148 = vector.broadcast %cst_56 : f32 to vector<16x64xf32>
    %149 = arith.mulf %148, %147 : vector<16x64xf32>
    %cst_57 = arith.constant -1.45315206 : f32
    %150 = vector.broadcast %cst_57 : f32 to vector<16x64xf32>
    %151 = arith.addf %149, %150 : vector<16x64xf32>
    %152 = arith.mulf %151, %147 : vector<16x64xf32>
    %cst_58 = arith.constant 1.42141378 : f32
    %153 = vector.broadcast %cst_58 : f32 to vector<16x64xf32>
    %154 = arith.addf %152, %153 : vector<16x64xf32>
    %155 = arith.mulf %154, %147 : vector<16x64xf32>
    %cst_59 = arith.constant -0.284496725 : f32
    %156 = vector.broadcast %cst_59 : f32 to vector<16x64xf32>
    %157 = arith.addf %155, %156 : vector<16x64xf32>
    %158 = arith.mulf %157, %147 : vector<16x64xf32>
    %cst_60 = arith.constant 0.254829586 : f32
    %159 = vector.broadcast %cst_60 : f32 to vector<16x64xf32>
    %160 = arith.addf %158, %159 : vector<16x64xf32>
    %161 = arith.mulf %160, %147 : vector<16x64xf32>
    %cst_61 = arith.constant 0.000000e+00 : f32
    %162 = vector.broadcast %cst_61 : f32 to vector<16x64xf32>
    %163 = arith.subf %162, %142 : vector<16x64xf32>
    %164 = arith.mulf %163, %142 : vector<16x64xf32>
    %165 = math.exp %164 : vector<16x64xf32>
    %166 = arith.mulf %161, %165 : vector<16x64xf32>
    %cst_62 = arith.constant 1.000000e+00 : f32
    %167 = vector.broadcast %cst_62 : f32 to vector<16x64xf32>
    %168 = arith.subf %167, %166 : vector<16x64xf32>
    %169 = arith.mulf %141, %168 : vector<16x64xf32>
    %cst_63 = arith.constant 1.000000e+00 : f32
    %170 = vector.broadcast %cst_63 : f32 to vector<16x64xf32>
    %171 = arith.addf %170, %169 : vector<16x64xf32>
    %172 = arith.mulf %134, %171 : vector<16x64xf32>
    %173 = arith.truncf %172 : vector<16x64xf32> to vector<16x64xbf16>
    %c0_64 = arith.constant 0 : index
    %c0_65 = arith.constant 0 : index
    %c0_66 = arith.constant 0 : index
    %174 = vector.load %arg14[%c0_64, %c0_65, %c0_66] : memref<1x64x32xbf16, #tpu.memory_space<vmem>>, vector<1x64x32xbf16>
    %175 = vector.shape_cast %174 : vector<1x64x32xbf16> to vector<64x32xbf16>
    %cst_67 = arith.constant dense<0.000000e+00> : vector<16x32xf32>
    %176 = tpu.matmul %173, %175, %cst_67 {dimension_numbers = #tpu.dot_dimension_numbers<[1], [0], [0], [1], [0, 0, 1, 1], [], []>} : vector<16x64xbf16>, vector<64x32xbf16>, vector<16x32xf32> -> vector<16x32xf32>
    %c0_68 = arith.constant 0 : index
    %c0_69 = arith.constant 0 : index
    %c0_70 = arith.constant 0 : index
    %177 = vector.load %arg15[%c0_68, %c0_69, %c0_70] : memref<1x1x32xf32, #tpu.memory_space<vmem>>, vector<1x1x32xf32>
    %178 = vector.shape_cast %177 : vector<1x1x32xf32> to vector<1x32xf32>
    %179 = vector.broadcast %178 : vector<1x32xf32> to vector<16x32xf32>
    %180 = arith.addf %176, %179 : vector<16x32xf32>
    %181 = vector.shape_cast %180 : vector<16x32xf32> to vector<2x8x32xf32>
    %182 = arith.addf %97, %181 : vector<2x8x32xf32>
    %c1_i32 = arith.constant 1 : i32
    %183 = arith.cmpi slt, %arg1, %c1_i32 : i32
    %184 = arith.extui %183 : i1 to i32
    %c0_i32_71 = arith.constant 0 : i32
    %185 = arith.cmpi ne, %184, %c0_i32_71 : i32
    scf.if %185 {
      %c0_74 = arith.constant 0 : index
      %c0_75 = arith.constant 0 : index
      %c0_76 = arith.constant 0 : index
      %189 = vector.load %arg18[%c0_74, %c0_75, %c0_76] : memref<2x8x32xf32, #tpu.memory_space<vmem>>, vector<2x8x32xf32>
      tpu.vector_store %arg18[%c0_74, %c0_75, %c0_76], %182 {strides = array<i32>} : memref<2x8x32xf32, #tpu.memory_space<vmem>>, vector<2x8x32xf32>,
    } else {
    }
    %c1_i32_72 = arith.constant 1 : i32
    %186 = arith.cmpi eq, %arg1, %c1_i32_72 : i32
    %187 = arith.extui %186 : i1 to i32
    %c0_i32_73 = arith.constant 0 : i32
    %188 = arith.cmpi ne, %187, %c0_i32_73 : i32
    scf.if %188 {
      %c0_74 = arith.constant 0 : index
      %c0_75 = arith.constant 0 : index
      %189 = vector.load %arg16[%c0_74, %c0_75] : memref<1x32xf32, #tpu.memory_space<vmem>>, vector<1x32xf32>
      %c0_76 = arith.constant 0 : index
      %c0_77 = arith.constant 0 : index
      %190 = vector.load %arg17[%c0_76, %c0_77] : memref<1x32xf32, #tpu.memory_space<vmem>>, vector<1x32xf32>
      %cst_78 = arith.constant dense<0.000000e+00> : vector<2x8xf32>
      %191 = vector.multi_reduction <add>, %182, %cst_78 [2] : vector<2x8x32xf32> to vector<2x8xf32>
      %192 = vector.shape_cast %191 : vector<2x8xf32> to vector<2x8x1xf32>
      %cst_79 = arith.constant 3.200000e+01 : f32
      %193 = vector.broadcast %cst_79 : f32 to vector<2x8x1xf32>
      %194 = arith.divf %192, %193 : vector<2x8x1xf32>
      %195 = vector.broadcast %194 : vector<2x8x1xf32> to vector<2x8x32xf32>
      %196 = arith.subf %182, %195 : vector<2x8x32xf32>
      %197 = arith.mulf %196, %196 : vector<2x8x32xf32>
      %cst_80 = arith.constant dense<0.000000e+00> : vector<2x8xf32>
      %198 = vector.multi_reduction <add>, %197, %cst_80 [2] : vector<2x8x32xf32> to vector<2x8xf32>
      %199 = vector.shape_cast %198 : vector<2x8xf32> to vector<2x8x1xf32>
      %cst_81 = arith.constant 3.200000e+01 : f32
      %200 = vector.broadcast %cst_81 : f32 to vector<2x8x1xf32>
      %201 = arith.divf %199, %200 : vector<2x8x1xf32>
      %cst_82 = arith.constant 9.99999997E-7 : f32
      %202 = vector.broadcast %cst_82 : f32 to vector<2x8x1xf32>
      %203 = arith.addf %201, %202 : vector<2x8x1xf32>
      %204 = math.rsqrt %203 : vector<2x8x1xf32>
      %205 = vector.broadcast %204 : vector<2x8x1xf32> to vector<2x8x32xf32>
      %206 = arith.mulf %196, %205 : vector<2x8x32xf32>
      %207 = vector.shape_cast %189 : vector<1x32xf32> to vector<1x1x32xf32>
      %208 = vector.broadcast %207 : vector<1x1x32xf32> to vector<2x8x32xf32>
      %209 = arith.mulf %206, %208 : vector<2x8x32xf32>
      %210 = vector.shape_cast %190 : vector<1x32xf32> to vector<1x1x32xf32>
      %211 = vector.broadcast %210 : vector<1x1x32xf32> to vector<2x8x32xf32>
      %212 = arith.addf %209, %211 : vector<2x8x32xf32>
      %c0_83 = arith.constant 0 : index
      %c0_84 = arith.constant 0 : index
      %c0_85 = arith.constant 0 : index
      %213 = vector.load %arg18[%c0_83, %c0_84, %c0_85] : memref<2x8x32xf32, #tpu.memory_space<vmem>>, vector<2x8x32xf32>
      tpu.vector_store %arg18[%c0_83, %c0_84, %c0_85], %212 {strides = array<i32>} : memref<2x8x32xf32, #tpu.memory_space<vmem>>, vector<2x8x32xf32>,
    } else {
    }
    return
  }
  func.func @transform_0(%arg0: i32, %arg1: i32) -> (i32, i32, i32) {
    %c0_i32 = arith.constant 0 : i32
    %c0_i32_0 = arith.constant 0 : i32
    %c0_i32_1 = arith.constant 0 : i32
    return %arg0, %c0_i32, %c0_i32_0 : i32, i32, i32
  }
  func.func @transform_1(%arg0: i32, %arg1: i32) -> (i32, i32, i32) {
    %c0_i32 = arith.constant 0 : i32
    %c0_i32_0 = arith.constant 0 : i32
    %c0_i32_1 = arith.constant 0 : i32
    %c0_i32_2 = arith.constant 0 : i32
    return %c0_i32, %c0_i32_0, %c0_i32_1 : i32, i32, i32
  }
  func.func @transform_2(%arg0: i32, %arg1: i32) -> (i32, i32, i32) {
    %c0_i32 = arith.constant 0 : i32
    %c0_i32_0 = arith.constant 0 : i32
    %c0_i32_1 = arith.constant 0 : i32
    return %arg1, %c0_i32, %c0_i32_0 : i32, i32, i32
  }
  func.func @transform_3(%arg0: i32, %arg1: i32) -> (i32, i32, i32) {
    %c0_i32 = arith.constant 0 : i32
    %c0_i32_0 = arith.constant 0 : i32
    %c0_i32_1 = arith.constant 0 : i32
    return %arg1, %c0_i32, %c0_i32_0 : i32, i32, i32
  }
  func.func @transform_4(%arg0: i32, %arg1: i32) -> (i32, i32, i32) {
    %c0_i32 = arith.constant 0 : i32
    %c0_i32_0 = arith.constant 0 : i32
    %c0_i32_1 = arith.constant 0 : i32
    return %arg1, %c0_i32, %c0_i32_0 : i32, i32, i32
  }
  func.func @transform_5(%arg0: i32, %arg1: i32) -> (i32, i32, i32) {
    %c0_i32 = arith.constant 0 : i32
    %c0_i32_0 = arith.constant 0 : i32
    %c0_i32_1 = arith.constant 0 : i32
    return %arg1, %c0_i32, %c0_i32_0 : i32, i32, i32
  }
  func.func @transform_6(%arg0: i32, %arg1: i32) -> (i32, i32, i32) {
    %c0_i32 = arith.constant 0 : i32
    %c0_i32_0 = arith.constant 0 : i32
    %c0_i32_1 = arith.constant 0 : i32
    return %arg1, %c0_i32, %c0_i32_0 : i32, i32, i32
  }
  func.func @transform_7(%arg0: i32, %arg1: i32) -> (i32, i32, i32) {
    %c0_i32 = arith.constant 0 : i32
    %c0_i32_0 = arith.constant 0 : i32
    %c0_i32_1 = arith.constant 0 : i32
    return %arg1, %c0_i32, %c0_i32_0 : i32, i32, i32
  }
  func.func @transform_8(%arg0: i32, %arg1: i32) -> (i32, i32, i32) {
    %c0_i32 = arith.constant 0 : i32
    %c0_i32_0 = arith.constant 0 : i32
    %c0_i32_1 = arith.constant 0 : i32
    return %arg1, %c0_i32, %c0_i32_0 : i32, i32, i32
  }
  func.func @transform_9(%arg0: i32, %arg1: i32) -> (i32, i32, i32) {
    %c0_i32 = arith.constant 0 : i32
    %c0_i32_0 = arith.constant 0 : i32
    %c0_i32_1 = arith.constant 0 : i32
    return %arg1, %c0_i32, %c0_i32_0 : i32, i32, i32
  }
  func.func @transform_10(%arg0: i32, %arg1: i32) -> (i32, i32, i32) {
    %c0_i32 = arith.constant 0 : i32
    %c0_i32_0 = arith.constant 0 : i32
    %c0_i32_1 = arith.constant 0 : i32
    return %arg1, %c0_i32, %c0_i32_0 : i32, i32, i32
  }
  func.func @transform_11(%arg0: i32, %arg1: i32) -> (i32, i32, i32) {
    %c0_i32 = arith.constant 0 : i32
    %c0_i32_0 = arith.constant 0 : i32
    %c0_i32_1 = arith.constant 0 : i32
    return %arg1, %c0_i32, %c0_i32_0 : i32, i32, i32
  }
  func.func @transform_12(%arg0: i32, %arg1: i32) -> (i32, i32, i32) {
    %c0_i32 = arith.constant 0 : i32
    %c0_i32_0 = arith.constant 0 : i32
    %c0_i32_1 = arith.constant 0 : i32
    return %arg1, %c0_i32, %c0_i32_0 : i32, i32, i32
  }
  func.func @transform_13(%arg0: i32, %arg1: i32) -> (i32, i32, i32) {
    %c0_i32 = arith.constant 0 : i32
    %c0_i32_0 = arith.constant 0 : i32
    %c0_i32_1 = arith.constant 0 : i32
    return %arg1, %c0_i32, %c0_i32_0 : i32, i32, i32
  }
  func.func @transform_14(%arg0: i32, %arg1: i32) -> (i32, i32) {
    %c0_i32 = arith.constant 0 : i32
    %c0_i32_0 = arith.constant 0 : i32
    %c0_i32_1 = arith.constant 0 : i32
    return %c0_i32, %c0_i32_0 : i32, i32
  }
  func.func @transform_15(%arg0: i32, %arg1: i32) -> (i32, i32) {
    %c0_i32 = arith.constant 0 : i32
    %c0_i32_0 = arith.constant 0 : i32
    %c0_i32_1 = arith.constant 0 : i32
    return %c0_i32, %c0_i32_0 : i32, i32
  }
  func.func @transform_16(%arg0: i32, %arg1: i32) -> (i32, i32, i32) {
    %c0_i32 = arith.constant 0 : i32
    %c0_i32_0 = arith.constant 0 : i32
    %c0_i32_1 = arith.constant 0 : i32
    return %arg0, %c0_i32, %c0_i32_0 : i32, i32, i32
  }
}

</mosaic_0001>

<llo_original>
// kernel: encoder_forward.1
$region0: #{encoder_forward.1}
  #allocation0 [shape = 'u32[]', space=smem, size = 0x4, offset = 0x4, fixed_abs, tag = 'smem constant byte address 0x4 - core index']
  #allocation1 [shape = 'u32[144,128]{1,0:T(1,128)}', space=vmem, size = 0x12000, scoped, tag = 'internal scratch']
  %s0 = inlined_call_operand.hbm [shape: f32[2,8,32], index: 0, kind: input, shape index: {}]
  %s1 = inlined_call_operand.vmem [shape: f32[1,8,32], index: 1, kind: input, shape index: {}]
  %s2 = inlined_call_operand.vmem [shape: f32[2,1,32], index: 2, kind: input, shape index: {}]
  %s3 = inlined_call_operand.vmem [shape: f32[2,1,32], index: 3, kind: input, shape index: {}]
  %s4 = inlined_call_operand.vmem [shape: bf16[2,32,96], index: 4, kind: input, shape index: {}]
  %s5 = inlined_call_operand.vmem [shape: f32[2,1,96], index: 5, kind: input, shape index: {}]
  %s6 = inlined_call_operand.vmem [shape: bf16[2,32,32], index: 6, kind: input, shape index: {}]
  %s7 = inlined_call_operand.hbm [shape: f32[2,1,32], index: 7, kind: input, shape index: {}]
  %s8 = inlined_call_operand.vmem [shape: f32[2,1,32], index: 8, kind: input, shape index: {}]
  %s9 = inlined_call_operand.hbm [shape: f32[2,1,32], index: 9, kind: input, shape index: {}]
  %s10 = inlined_call_operand.vmem [shape: bf16[2,32,64], index: 10, kind: input, shape index: {}]
  %s11 = inlined_call_operand.hbm [shape: f32[2,1,64], index: 11, kind: input, shape index: {}]
  %s12 = inlined_call_operand.vmem [shape: bf16[2,64,32], index: 12, kind: input, shape index: {}]
  %s13 = inlined_call_operand.hbm [shape: f32[2,1,32], index: 13, kind: input, shape index: {}]
  %s14 = inlined_call_operand.vmem [shape: f32[1,32], index: 14, kind: input, shape index: {}]
  %s15 = inlined_call_operand.hbm [shape: f32[1,32], index: 15, kind: input, shape index: {}]
  %s16 = inlined_call_operand.hbm [shape: f32[2,8,32], index: 16, kind: output, shape index: {}]
  %s17 = sld [smem:[#allocation0]]
  $region133: #{encoder_forward.1} parent=0
    _
  %s19 = ssub.s32 1, %s17
  %s20 = scalar_select 0, %s19, %s17
  $region1: #{encoder_forward.1} parent=0
    #allocation2 [shape = 'u8[8192]{0}', space=vmem, size = 0x2000, scoped, tag = 'input window, operand 0, single buffered']
    #allocation3 [shape = 's32[2]{0}', space=sflag, size = 0x8, scoped, tag = 'scoped memory for encoder_forward.1']
    #allocation4 [shape = 's32[2]{0}', space=sflag, size = 0x8, scoped, tag = 'scoped memory for encoder_forward.1']
    #allocation5 [shape = 'u8[1024]{0}', space=vmem, size = 0x400, scoped, tag = 'input window, operand 7']
    #allocation6 [shape = 's32[2]{0}', space=sflag, size = 0x8, scoped, tag = 'scoped memory for encoder_forward.1']
    #allocation7 [shape = 'u8[1024]{0}', space=vmem, size = 0x400, scoped, tag = 'input window, operand 9']
    #allocation8 [shape = 'u8[1024]{0}', space=vmem, size = 0x400, scoped, tag = 'input window, operand 11']
    #allocation9 [shape = 's32[2]{0}', space=sflag, size = 0x8, scoped, tag = 'scoped memory for encoder_forward.1']
    #allocation10 [shape = 'u8[1024]{0}', space=vmem, size = 0x400, scoped, tag = 'input window, operand 13']
    #allocation11 [shape = 'u8[512]{0}', space=vmem, size = 0x400, scoped, tag = 'input window, operand 15, single buffered']
    #allocation12 [shape = 's32[1]{0}', space=sflag, size = 0x4, scoped, tag = 'scoped memory for encoder_forward.1']
    #allocation13 [shape = 'u8[8192]{0}', space=vmem, size = 0x2000, scoped, tag = 'output window, operand 0, single buffered']
    %21 = vsyncpa [#allocation3], 0
    %22 = vsyncpa [#allocation6], 0
    %s23 = scalar_lea.sflag [#allocation6], 1
    %24 = vsyncpa %s23, 0
    %25 = vsyncpa [#allocation9], 0
    %s26 = scalar_lea.sflag [#allocation9], 1
    %27 = vsyncpa %s26, 0
    %28 = vsyncpa [#allocation12], 0
    %29 = vsyncpa [#allocation4], 0
    loop: start=0, step=1, limit=4
    $region2: #{encoder_forward.1} parent=1 // loop_pre_header
      _
    $region3: #{encoder_forward.1} parent=1 // loop_header
      %s31 = sphi 0, %s35
      %p32 = scmp.ge.s32.totalorder %s31, 4
      %s38 = sphi 0, %s50
      %s39 = sphi 0, %s46
      %s40 = sphi 0, %s38
      %s41 = sphi 0, %s39
      %s42 = sphi 0, %s40
      %s43 = sphi 0, %s41
      %s53 = sphi 0, %s55
      %s56 = sphi 0, %s53
      %s57 = sphi 0, %s56
      %s73 = sphi 0, %s57
      %s77 = sphi 0, %s77
      %s79 = sphi 0, %s77
      %s80 = sphi 0, %s79
      %s94 = sphi 0, %s80
      %s100 = sphi 0, %s102
      %s103 = sphi 0, %s100
      %s104 = sphi 0, %s103
      %s120 = sphi 0, %s104
      %s126 = sphi 0, %s128
      %s129 = sphi 0, %s126
      %s130 = sphi 0, %s129
      %s146 = sphi 0, %s130
      %s152 = sphi 0, %s154
      %s155 = sphi 0, %s152
      %s156 = sphi 0, %s155
      %s172 = sphi 0, %s156
      %s178 = sphi 0, %s180
      %s181 = sphi 0, %s178
      %s182 = sphi 0, %s181
      %s198 = sphi 0, %s182
      %s204 = sphi 0, %s206
      %s207 = sphi 0, %s204
      %s208 = sphi 0, %s207
      %s224 = sphi 0, %s208
      %s230 = sphi 0, %s232
      %s233 = sphi 0, %s230
      %s234 = sphi 0, %s233
      %s250 = sphi 0, %s234
      %s256 = sphi 0, %s258
      %s259 = sphi 0, %s256
      %s260 = sphi 0, %s259
      %s276 = sphi 0, %s260
      %s282 = sphi 0, %s284
      %s285 = sphi 0, %s282
      %s286 = sphi 0, %s285
      %s302 = sphi 0, %s286
      %s308 = sphi 0, %s310
      %s311 = sphi 0, %s308
      %s312 = sphi 0, %s311
      %s328 = sphi 0, %s312
      %s334 = sphi 0, %s336
      %s337 = sphi 0, %s334
      %s338 = sphi 0, %s337
      %s354 = sphi 0, %s338
      %s360 = sphi 0, %s362
      %s363 = sphi 0, %s360
      %s364 = sphi 0, %s363
      %s380 = sphi 0, %s364
      %s386 = sphi 0, %s388
      %s389 = sphi 0, %s386
      %s390 = sphi 0, %s389
      %s406 = sphi 0, %s390
      %s410 = sphi 0, %s410
      %s412 = sphi 0, %s410
      %s413 = sphi 0, %s412
      %s427 = sphi 0, %s413
      %s431 = sphi 0, %s431
      %s433 = sphi 0, %s431
      %s434 = sphi 0, %s433
      %s448 = sphi 0, %s434
      %s454 = sphi 0, %s456
      %s457 = sphi 0, %s454
      %s458 = sphi 0, %s457
      %s474 = sphi 0, %s458
    $region4: #{encoder_forward.1} parent=1 // loop_header_branch
      %34 = sbr.rel (%p32) target = $region8
    $region5: #{encoder_forward.1} parent=1 // loop_body
      %s36 = ssub.s32 %s31, 1
      %s37 = ssub.s32 %s31, 2
      %s44 = sadd.s32 1, %s39
      %p45 = scmp.ge.s32.totalorder %s44, 2
      %s46 = scalar_select %p45, 0, %s44
      %s47 = sadd.s32 1, %s38
      %s48 = scalar_select %p45, %s47, %s38
      %p49 = scmp.ge.s32.totalorder %s48, 1
      %s50 = scalar_select %p49, 0, %s48
      %s51 = ssub.s32 %s38, %s50
      %p52 = scmp.eq.s32.totalorder %s51, 0
      %s54 = sadd.s32 %s53, 1
      %s55 = scalar_select %p52, %s53, %s54
      %p58 = pneg %p52
      %p59 = scmp.eq.s32.totalorder %s31, 1
      %p60 = por %p58, %p59
      %p61 = scmp.ne.s32.totalorder %s53, %s56
      %p62 = scmp.eq.s32.totalorder %s31, 0
      %p63 = por %p61, %p62
      %p64 = scmp.ne.s32.totalorder %s53, %s56
      %p65 = scmp.eq.s32.totalorder %s36, 1
      %p66 = por %p64, %p65
      %p67 = scmp.ne.s32.totalorder %s56, %s57
      %p68 = scmp.eq.s32.totalorder %s36, 0
      %p69 = por %p67, %p68
      %p70 = scmp.ne.s32.totalorder %s56, %s57
      %p71 = scmp.eq.s32.totalorder %s37, 1
      %p72 = por %p70, %p71
      %p74 = scmp.ne.s32.totalorder %s57, %s73
      %p75 = scmp.eq.s32.totalorder %s37, 0
      %p76 = por %p74, %p75
      %s78 = sadd.s32 %s77, 1
      %p81 = scmp.eq.s32.totalorder %s31, 1
      %p82 = scmp.ne.s32.totalorder %s77, %s79
      %p83 = scmp.eq.s32.totalorder %s31, 0
      %p84 = por %p82, %p83
      %p85 = scmp.ne.s32.totalorder %s77, %s79
      %p86 = scmp.eq.s32.totalorder %s36, 1
      %p87 = por %p85, %p86
      %p88 = scmp.ne.s32.totalorder %s79, %s80
      %p89 = scmp.eq.s32.totalorder %s36, 0
      %p90 = por %p88, %p89
      %p91 = scmp.ne.s32.totalorder %s79, %s80
      %p92 = scmp.eq.s32.totalorder %s37, 1
      %p93 = por %p91, %p92
      %p95 = scmp.ne.s32.totalorder %s80, %s94
      %p96 = scmp.eq.s32.totalorder %s37, 0
      %p97 = por %p95, %p96
      %s98 = ssub.s32 %s39, %s46
      %p99 = scmp.eq.s32.totalorder %s98, 0
      %s101 = sadd.s32 %s100, 1
      %s102 = scalar_select %p99, %s100, %s101
      %p105 = pneg %p99
      %p106 = scmp.eq.s32.totalorder %s31, 1
      %p107 = por %p105, %p106
      %p108 = scmp.ne.s32.totalorder %s100, %s103
      %p109 = scmp.eq.s32.totalorder %s31, 0
      %p110 = por %p108, %p109
      %p111 = scmp.ne.s32.totalorder %s100, %s103
      %p112 = scmp.eq.s32.totalorder %s36, 1
      %p113 = por %p111, %p112
      %p114 = scmp.ne.s32.totalorder %s103, %s104
      %p115 = scmp.eq.s32.totalorder %s36, 0
      %p116 = por %p114, %p115
      %p117 = scmp.ne.s32.totalorder %s103, %s104
      %p118 = scmp.eq.s32.totalorder %s37, 1
      %p119 = por %p117, %p118
      %p121 = scmp.ne.s32.totalorder %s104, %s120
      %p122 = scmp.eq.s32.totalorder %s37, 0
      %p123 = por %p121, %p122
      %s124 = ssub.s32 %s39, %s46
      %p125 = scmp.eq.s32.totalorder %s124, 0
      %s127 = sadd.s32 %s126, 1
      %s128 = scalar_select %p125, %s126, %s127
      %p131 = pneg %p125
      %p132 = scmp.eq.s32.totalorder %s31, 1
      %p133 = por %p131, %p132
      %p134 = scmp.ne.s32.totalorder %s126, %s129
      %p135 = scmp.eq.s32.totalorder %s31, 0
      %p136 = por %p134, %p135
      %p137 = scmp.ne.s32.totalorder %s126, %s129
      %p138 = scmp.eq.s32.totalorder %s36, 1
      %p139 = por %p137, %p138
      %p140 = scmp.ne.s32.totalorder %s129, %s130
      %p141 = scmp.eq.s32.totalorder %s36, 0
      %p142 = por %p140, %p141
      %p143 = scmp.ne.s32.totalorder %s129, %s130
      %p144 = scmp.eq.s32.totalorder %s37, 1
      %p145 = por %p143, %p144
      %p147 = scmp.ne.s32.totalorder %s130, %s146
      %p148 = scmp.eq.s32.totalorder %s37, 0
      %p149 = por %p147, %p148
      %s150 = ssub.s32 %s39, %s46
      %p151 = scmp.eq.s32.totalorder %s150, 0
      %s153 = sadd.s32 %s152, 1
      %s154 = scalar_select %p151, %s152, %s153
      %p157 = pneg %p151
      %p158 = scmp.eq.s32.totalorder %s31, 1
      %p159 = por %p157, %p158
      %p160 = scmp.ne.s32.totalorder %s152, %s155
      %p161 = scmp.eq.s32.totalorder %s31, 0
      %p162 = por %p160, %p161
      %p163 = scmp.ne.s32.totalorder %s152, %s155
      %p164 = scmp.eq.s32.totalorder %s36, 1
      %p165 = por %p163, %p164
      %p166 = scmp.ne.s32.totalorder %s155, %s156
      %p167 = scmp.eq.s32.totalorder %s36, 0
      %p168 = por %p166, %p167
      %p169 = scmp.ne.s32.totalorder %s155, %s156
      %p170 = scmp.eq.s32.totalorder %s37, 1
      %p171 = por %p169, %p170
      %p173 = scmp.ne.s32.totalorder %s156, %s172
      %p174 = scmp.eq.s32.totalorder %s37, 0
      %p175 = por %p173, %p174
      %s176 = ssub.s32 %s39, %s46
      %p177 = scmp.eq.s32.totalorder %s176, 0
      %s179 = sadd.s32 %s178, 1
      %s180 = scalar_select %p177, %s178, %s179
      %p183 = pneg %p177
      %p184 = scmp.eq.s32.totalorder %s31, 1
      %p185 = por %p183, %p184
      %p186 = scmp.ne.s32.totalorder %s178, %s181
      %p187 = scmp.eq.s32.totalorder %s31, 0
      %p188 = por %p186, %p187
      %p189 = scmp.ne.s32.totalorder %s178, %s181
      %p190 = scmp.eq.s32.totalorder %s36, 1
      %p191 = por %p189, %p190
      %p192 = scmp.ne.s32.totalorder %s181, %s182
      %p193 = scmp.eq.s32.totalorder %s36, 0
      %p194 = por %p192, %p193
      %p195 = scmp.ne.s32.totalorder %s181, %s182
      %p196 = scmp.eq.s32.totalorder %s37, 1
      %p197 = por %p195, %p196
      %p199 = scmp.ne.s32.totalorder %s182, %s198
      %p200 = scmp.eq.s32.totalorder %s37, 0
      %p201 = por %p199, %p200
      %s202 = ssub.s32 %s39, %s46
      %p203 = scmp.eq.s32.totalorder %s202, 0
      %s205 = sadd.s32 %s204, 1
      %s206 = scalar_select %p203, %s204, %s205
      %p209 = pneg %p203
      %p210 = scmp.eq.s32.totalorder %s31, 1
      %p211 = por %p209, %p210
      %p212 = scmp.ne.s32.totalorder %s204, %s207
      %p213 = scmp.eq.s32.totalorder %s31, 0
      %p214 = por %p212, %p213
      %p215 = scmp.ne.s32.totalorder %s204, %s207
      %p216 = scmp.eq.s32.totalorder %s36, 1
      %p217 = por %p215, %p216
      %p218 = scmp.ne.s32.totalorder %s207, %s208
      %p219 = scmp.eq.s32.totalorder %s36, 0
      %p220 = por %p218, %p219
      %p221 = scmp.ne.s32.totalorder %s207, %s208
      %p222 = scmp.eq.s32.totalorder %s37, 1
      %p223 = por %p221, %p222
      %p225 = scmp.ne.s32.totalorder %s208, %s224
      %p226 = scmp.eq.s32.totalorder %s37, 0
      %p227 = por %p225, %p226
      %s228 = ssub.s32 %s39, %s46
      %p229 = scmp.eq.s32.totalorder %s228, 0
      %s231 = sadd.s32 %s230, 1
      %s232 = scalar_select %p229, %s230, %s231
      %p235 = pneg %p229
      %p236 = scmp.eq.s32.totalorder %s31, 1
      %p237 = por %p235, %p236
      %p238 = scmp.ne.s32.totalorder %s230, %s233
      %p239 = scmp.eq.s32.totalorder %s31, 0
      %p240 = por %p238, %p239
      %p241 = scmp.ne.s32.totalorder %s230, %s233
      %p242 = scmp.eq.s32.totalorder %s36, 1
      %p243 = por %p241, %p242
      %p244 = scmp.ne.s32.totalorder %s233, %s234
      %p245 = scmp.eq.s32.totalorder %s36, 0
      %p246 = por %p244, %p245
      %p247 = scmp.ne.s32.totalorder %s233, %s234
      %p248 = scmp.eq.s32.totalorder %s37, 1
      %p249 = por %p247, %p248
      %p251 = scmp.ne.s32.totalorder %s234, %s250
      %p252 = scmp.eq.s32.totalorder %s37, 0
      %p253 = por %p251, %p252
      %s254 = ssub.s32 %s39, %s46
      %p255 = scmp.eq.s32.totalorder %s254, 0
      %s257 = sadd.s32 %s256, 1
      %s258 = scalar_select %p255, %s256, %s257
      %p261 = pneg %p255
      %p262 = scmp.eq.s32.totalorder %s31, 1
      %p263 = por %p261, %p262
      %p264 = scmp.ne.s32.totalorder %s256, %s259
      %p265 = scmp.eq.s32.totalorder %s31, 0
      %p266 = por %p264, %p265
      %p267 = scmp.ne.s32.totalorder %s256, %s259
      %p268 = scmp.eq.s32.totalorder %s36, 1
      %p269 = por %p267, %p268
      %p270 = scmp.ne.s32.totalorder %s259, %s260
      %p271 = scmp.eq.s32.totalorder %s36, 0
      %p272 = por %p270, %p271
      %p273 = scmp.ne.s32.totalorder %s259, %s260
      %p274 = scmp.eq.s32.totalorder %s37, 1
      %p275 = por %p273, %p274
      %p277 = scmp.ne.s32.totalorder %s260, %s276
      %p278 = scmp.eq.s32.totalorder %s37, 0
      %p279 = por %p277, %p278
      %s280 = ssub.s32 %s39, %s46
      %p281 = scmp.eq.s32.totalorder %s280, 0
      %s283 = sadd.s32 %s282, 1
      %s284 = scalar_select %p281, %s282, %s283
      %p287 = pneg %p281
      %p288 = scmp.eq.s32.totalorder %s31, 1
      %p289 = por %p287, %p288
      %p290 = scmp.ne.s32.totalorder %s282, %s285
      %p291 = scmp.eq.s32.totalorder %s31, 0
      %p292 = por %p290, %p291
      %p293 = scmp.ne.s32.totalorder %s282, %s285
      %p294 = scmp.eq.s32.totalorder %s36, 1
      %p295 = por %p293, %p294
      %p296 = scmp.ne.s32.totalorder %s285, %s286
      %p297 = scmp.eq.s32.totalorder %s36, 0
      %p298 = por %p296, %p297
      %p299 = scmp.ne.s32.totalorder %s285, %s286
      %p300 = scmp.eq.s32.totalorder %s37, 1
      %p301 = por %p299, %p300
      %p303 = scmp.ne.s32.totalorder %s286, %s302
      %p304 = scmp.eq.s32.totalorder %s37, 0
      %p305 = por %p303, %p304
      %s306 = ssub.s32 %s39, %s46
      %p307 = scmp.eq.s32.totalorder %s306, 0
      %s309 = sadd.s32 %s308, 1
      %s310 = scalar_select %p307, %s308, %s309
      %p313 = pneg %p307
      %p314 = scmp.eq.s32.totalorder %s31, 1
      %p315 = por %p313, %p314
      %p316 = scmp.ne.s32.totalorder %s308, %s311
      %p317 = scmp.eq.s32.totalorder %s31, 0
      %p318 = por %p316, %p317
      %p319 = scmp.ne.s32.totalorder %s308, %s311
      %p320 = scmp.eq.s32.totalorder %s36, 1
      %p321 = por %p319, %p320
      %p322 = scmp.ne.s32.totalorder %s311, %s312
      %p323 = scmp.eq.s32.totalorder %s36, 0
      %p324 = por %p322, %p323
      %p325 = scmp.ne.s32.totalorder %s311, %s312
      %p326 = scmp.eq.s32.totalorder %s37, 1
      %p327 = por %p325, %p326
      %p329 = scmp.ne.s32.totalorder %s312, %s328
      %p330 = scmp.eq.s32.totalorder %s37, 0
      %p331 = por %p329, %p330
      %s332 = ssub.s32 %s39, %s46
      %p333 = scmp.eq.s32.totalorder %s332, 0
      %s335 = sadd.s32 %s334, 1
      %s336 = scalar_select %p333, %s334, %s335
      %p339 = pneg %p333
      %p340 = scmp.eq.s32.totalorder %s31, 1
      %p341 = por %p339, %p340
      %p342 = scmp.ne.s32.totalorder %s334, %s337
      %p343 = scmp.eq.s32.totalorder %s31, 0
      %p344 = por %p342, %p343
      %p345 = scmp.ne.s32.totalorder %s334, %s337
      %p346 = scmp.eq.s32.totalorder %s36, 1
      %p347 = por %p345, %p346
      %p348 = scmp.ne.s32.totalorder %s337, %s338
      %p349 = scmp.eq.s32.totalorder %s36, 0
      %p350 = por %p348, %p349
      %p351 = scmp.ne.s32.totalorder %s337, %s338
      %p352 = scmp.eq.s32.totalorder %s37, 1
      %p353 = por %p351, %p352
      %p355 = scmp.ne.s32.totalorder %s338, %s354
      %p356 = scmp.eq.s32.totalorder %s37, 0
      %p357 = por %p355, %p356
      %s358 = ssub.s32 %s39, %s46
      %p359 = scmp.eq.s32.totalorder %s358, 0
      %s361 = sadd.s32 %s360, 1
      %s362 = scalar_select %p359, %s360, %s361
      %p365 = pneg %p359
      %p366 = scmp.eq.s32.totalorder %s31, 1
      %p367 = por %p365, %p366
      %p368 = scmp.ne.s32.totalorder %s360, %s363
      %p369 = scmp.eq.s32.totalorder %s31, 0
      %p370 = por %p368, %p369
      %p371 = scmp.ne.s32.totalorder %s360, %s363
      %p372 = scmp.eq.s32.totalorder %s36, 1
      %p373 = por %p371, %p372
      %p374 = scmp.ne.s32.totalorder %s363, %s364
      %p375 = scmp.eq.s32.totalorder %s36, 0
      %p376 = por %p374, %p375
      %p377 = scmp.ne.s32.totalorder %s363, %s364
      %p378 = scmp.eq.s32.totalorder %s37, 1
      %p379 = por %p377, %p378
      %p381 = scmp.ne.s32.totalorder %s364, %s380
      %p382 = scmp.eq.s32.totalorder %s37, 0
      %p383 = por %p381, %p382
      %s384 = ssub.s32 %s39, %s46
      %p385 = scmp.eq.s32.totalorder %s384, 0
      %s387 = sadd.s32 %s386, 1
      %s388 = scalar_select %p385, %s386, %s387
      %p391 = pneg %p385
      %p392 = scmp.eq.s32.totalorder %s31, 1
      %p393 = por %p391, %p392
      %p394 = scmp.ne.s32.totalorder %s386, %s389
      %p395 = scmp.eq.s32.totalorder %s31, 0
      %p396 = por %p394, %p395
      %p397 = scmp.ne.s32.totalorder %s386, %s389
      %p398 = scmp.eq.s32.totalorder %s36, 1
      %p399 = por %p397, %p398
      %p400 = scmp.ne.s32.totalorder %s389, %s390
      %p401 = scmp.eq.s32.totalorder %s36, 0
      %p402 = por %p400, %p401
      %p403 = scmp.ne.s32.totalorder %s389, %s390
      %p404 = scmp.eq.s32.totalorder %s37, 1
      %p405 = por %p403, %p404
      %p407 = scmp.ne.s32.totalorder %s390, %s406
      %p408 = scmp.eq.s32.totalorder %s37, 0
      %p409 = por %p407, %p408
      %s411 = sadd.s32 %s410, 1
      %p414 = scmp.eq.s32.totalorder %s31, 1
      %p415 = scmp.ne.s32.totalorder %s410, %s412
      %p416 = scmp.eq.s32.totalorder %s31, 0
      %p417 = por %p415, %p416
      %p418 = scmp.ne.s32.totalorder %s410, %s412
      %p419 = scmp.eq.s32.totalorder %s36, 1
      %p420 = por %p418, %p419
      %p421 = scmp.ne.s32.totalorder %s412, %s413
      %p422 = scmp.eq.s32.totalorder %s36, 0
      %p423 = por %p421, %p422
      %p424 = scmp.ne.s32.totalorder %s412, %s413
      %p425 = scmp.eq.s32.totalorder %s37, 1
      %p426 = por %p424, %p425
      %p428 = scmp.ne.s32.totalorder %s413, %s427
      %p429 = scmp.eq.s32.totalorder %s37, 0
      %p430 = por %p428, %p429
      %s432 = sadd.s32 %s431, 1
      %p435 = scmp.eq.s32.totalorder %s31, 1
      %p436 = scmp.ne.s32.totalorder %s431, %s433
      %p437 = scmp.eq.s32.totalorder %s31, 0
      %p438 = por %p436, %p437
      %p439 = scmp.ne.s32.totalorder %s431, %s433
      %p440 = scmp.eq.s32.totalorder %s36, 1
      %p441 = por %p439, %p440
      %p442 = scmp.ne.s32.totalorder %s433, %s434
      %p443 = scmp.eq.s32.totalorder %s36, 0
      %p444 = por %p442, %p443
      %p445 = scmp.ne.s32.totalorder %s433, %s434
      %p446 = scmp.eq.s32.totalorder %s37, 1
      %p447 = por %p445, %p446
      %p449 = scmp.ne.s32.totalorder %s434, %s448
      %p450 = scmp.eq.s32.totalorder %s37, 0
      %p451 = por %p449, %p450
      %s452 = ssub.s32 %s38, %s50
      %p453 = scmp.eq.s32.totalorder %s452, 0
      %s455 = sadd.s32 %s454, 1
      %s456 = scalar_select %p453, %s454, %s455
      %p459 = pneg %p453
      %p460 = scmp.eq.s32.totalorder %s31, 1
      %p461 = por %p459, %p460
      %p462 = scmp.ne.s32.totalorder %s454, %s457
      %p463 = scmp.eq.s32.totalorder %s31, 0
      %p464 = por %p462, %p463
      %p465 = scmp.ne.s32.totalorder %s454, %s457
      %p466 = scmp.eq.s32.totalorder %s36, 1
      %p467 = por %p465, %p466
      %p468 = scmp.ne.s32.totalorder %s457, %s458
      %p469 = scmp.eq.s32.totalorder %s36, 0
      %p470 = por %p468, %p469
      %p471 = scmp.ne.s32.totalorder %s457, %s458
      %p472 = scmp.eq.s32.totalorder %s37, 1
      %p473 = por %p471, %p472
      %p475 = scmp.ne.s32.totalorder %s458, %s474
      %p476 = scmp.eq.s32.totalorder %s37, 0
      %p477 = por %p475, %p476
      %p478 = scmp.le.s32.totalorder 1, %s31
      %p479 = scmp.lt.s32.totalorder %s31, 3
      %p480 = pnand %p478, %p479
      %p481 = pneg %p480
      // Predicated region
      $region9: #{encoder_forward.1} parent=5 // pred_check
        _
      $region10: #{encoder_forward.1} parent=5 // pred_check_branch
        %483 = sbr.rel (%p480) target = $region12
      $region11: #{encoder_forward.1} parent=5 // pred_region
        %s484 = ssub.s32 %s31, 1
        // Predicated region
        $region13: #{encoder_forward.1} parent=11 // pred_check
          %p485 = pneg %p69
        $region14: #{encoder_forward.1} parent=11 // pred_check_branch
          %487 = sbr.rel (%p485) target = $region16
        $region15: #{encoder_forward.1} parent=11 // pred_region
          %s488 = smul.u32 2, %s40
          %s490 = ssub.s32 256, 256
          %491 = vsyncadd [#allocation3], %s490
          %s492 = smul.addr %s488, 128
          %s493 = scalar_lea.hbm %s0, %s492
          %s494 = sshll.u32 [#allocation2], 4
          %s495 = int_to_ptr.vmem [resolvable:$true] %s494
          %500 = dma.hbm_to_vmem [thread:$0]  %s493, 256, %s495, [#allocation3], 128, 128, 8
        $region16: #{encoder_forward.1} parent=11 // pred_fallthru
          _
        // Predicated region
        $region17: #{encoder_forward.1} parent=11 // pred_check
          %p501 = pneg %p90
        $region18: #{encoder_forward.1} parent=11 // pred_check_branch
          %503 = sbr.rel (%p501) target = $region20
        $region19: #{encoder_forward.1} parent=11 // pred_region
          _
        $region20: #{encoder_forward.1} parent=11 // pred_fallthru
          _
        // Predicated region
        $region21: #{encoder_forward.1} parent=11 // pred_check
          %p504 = pneg %p423
        $region22: #{encoder_forward.1} parent=11 // pred_check_branch
          %506 = sbr.rel (%p504) target = $region24
        $region23: #{encoder_forward.1} parent=11 // pred_region
          _
        $region24: #{encoder_forward.1} parent=11 // pred_fallthru
          _
        // Predicated region
        $region25: #{encoder_forward.1} parent=11 // pred_check
          %p507 = pneg %p444
        $region26: #{encoder_forward.1} parent=11 // pred_check_branch
          %509 = sbr.rel (%p507) target = $region28
        $region27: #{encoder_forward.1} parent=11 // pred_region
          %s511 = ssub.s32 16, 16
          %512 = vsyncadd [#allocation12], %s511
          %s514 = sshll.u32 [#allocation11], 4
          %s515 = int_to_ptr.vmem [resolvable:$true] %s514
          %517 = dma.hbm_to_vmem [thread:$0]  %s15, 16, %s515, [#allocation12]
        $region28: #{encoder_forward.1} parent=11 // pred_fallthru
          _
      $region12: #{encoder_forward.1} parent=5 // pred_fallthru
        _
      %p518 = scmp.lt.s32.totalorder %s31, 2
      // Predicated region
      $region29: #{encoder_forward.1} parent=5 // pred_check
        %p519 = pneg %p518
      $region30: #{encoder_forward.1} parent=5 // pred_check_branch
        %521 = sbr.rel (%p519) target = $region32
      $region31: #{encoder_forward.1} parent=5 // pred_region
        // Predicated region
        $region33: #{encoder_forward.1} parent=31 // pred_check
          %p522 = pneg %p110
        $region34: #{encoder_forward.1} parent=31 // pred_check_branch
          %524 = sbr.rel (%p522) target = $region36
        $region35: #{encoder_forward.1} parent=31 // pred_region
          %p525 = scmp.lt.s32.totalorder %s39, 1
          %s526 = scalar_select %p525, %s39, 1
          %s527 = scalar_lea.vmem %s2, %s526
        $region36: #{encoder_forward.1} parent=31 // pred_fallthru
          _
        // Predicated region
        $region37: #{encoder_forward.1} parent=31 // pred_check
          %p528 = pneg %p136
        $region38: #{encoder_forward.1} parent=31 // pred_check_branch
          %530 = sbr.rel (%p528) target = $region40
        $region39: #{encoder_forward.1} parent=31 // pred_region
          %p531 = scmp.lt.s32.totalorder %s39, 1
          %s532 = scalar_select %p531, %s39, 1
          %s533 = scalar_lea.vmem %s3, %s532
        $region40: #{encoder_forward.1} parent=31 // pred_fallthru
          _
        // Predicated region
        $region41: #{encoder_forward.1} parent=31 // pred_check
          %p534 = pneg %p162
        $region42: #{encoder_forward.1} parent=31 // pred_check_branch
          %536 = sbr.rel (%p534) target = $region44
        $region43: #{encoder_forward.1} parent=31 // pred_region
          %p537 = scmp.lt.s32.totalorder %s39, 1
          %s538 = scalar_select %p537, %s39, 1
          %s539 = smul.addr %s538, 4
          %s540 = smul.addr %s539, 4
          %s541 = scalar_lea.vmem %s4, %s540
        $region44: #{encoder_forward.1} parent=31 // pred_fallthru
          _
        // Predicated region
        $region45: #{encoder_forward.1} parent=31 // pred_check
          %p542 = pneg %p188
        $region46: #{encoder_forward.1} parent=31 // pred_check_branch
          %544 = sbr.rel (%p542) target = $region48
        $region47: #{encoder_forward.1} parent=31 // pred_region
          %p545 = scmp.lt.s32.totalorder %s39, 1
          %s546 = scalar_select %p545, %s39, 1
          %s547 = scalar_lea.vmem %s5, %s546
        $region48: #{encoder_forward.1} parent=31 // pred_fallthru
          _
        // Predicated region
        $region49: #{encoder_forward.1} parent=31 // pred_check
          %p548 = pneg %p214
        $region50: #{encoder_forward.1} parent=31 // pred_check_branch
          %550 = sbr.rel (%p548) target = $region52
        $region51: #{encoder_forward.1} parent=31 // pred_region
          %p551 = scmp.lt.s32.totalorder %s39, 1
          %s552 = scalar_select %p551, %s39, 1
          %s553 = smul.addr %s552, 4
          %s554 = smul.addr %s553, 4
          %s555 = scalar_lea.vmem %s6, %s554
        $region52: #{encoder_forward.1} parent=31 // pred_fallthru
          _
        // Predicated region
        $region53: #{encoder_forward.1} parent=31 // pred_check
          %p556 = pneg %p240
        $region54: #{encoder_forward.1} parent=31 // pred_check_branch
          %558 = sbr.rel (%p556) target = $region56
        $region55: #{encoder_forward.1} parent=31 // pred_region
          %s559 = sand.u32 %s31, 1
          %s560 = scalar_lea.sflag [#allocation6], %s559
          %s561 = sand.u32 %s230, 1
          %s562 = scalar_lea.vmem [#allocation5], %s561
          %s564 = ssub.s32 16, 16
          %565 = vsyncadd %s560, %s564
          %s566 = smul.addr %s39, 16
          %s567 = scalar_lea.hbm %s7, %s566
          %s569 = sshll.u32 %s562, 4
          %s570 = int_to_ptr.vmem [resolvable:$true] %s569
          %572 = dma.hbm_to_vmem [thread:$0]  %s567, 16, %s570, %s560
        $region56: #{encoder_forward.1} parent=31 // pred_fallthru
          _
        // Predicated region
        $region57: #{encoder_forward.1} parent=31 // pred_check
          %p573 = pneg %p266
        $region58: #{encoder_forward.1} parent=31 // pred_check_branch
          %575 = sbr.rel (%p573) target = $region60
        $region59: #{encoder_forward.1} parent=31 // pred_region
          %p576 = scmp.lt.s32.totalorder %s39, 1
          %s577 = scalar_select %p576, %s39, 1
          %s578 = scalar_lea.vmem %s8, %s577
        $region60: #{encoder_forward.1} parent=31 // pred_fallthru
          _
        // Predicated region
        $region61: #{encoder_forward.1} parent=31 // pred_check
          %p579 = pneg %p292
        $region62: #{encoder_forward.1} parent=31 // pred_check_branch
          %581 = sbr.rel (%p579) target = $region64
        $region63: #{encoder_forward.1} parent=31 // pred_region
          %s582 = sand.u32 %s31, 1
          %s583 = scalar_lea.sflag [#allocation6], %s582
          %s584 = sand.u32 %s282, 1
          %s585 = scalar_lea.vmem [#allocation7], %s584
          %s587 = ssub.s32 16, 16
          %588 = vsyncadd %s583, %s587
          %s589 = smul.addr %s39, 16
          %s590 = scalar_lea.hbm %s9, %s589
          %s592 = sshll.u32 %s585, 4
          %s593 = int_to_ptr.vmem [resolvable:$true] %s592
          %595 = dma.hbm_to_vmem [thread:$0]  %s590, 16, %s593, %s583
        $region64: #{encoder_forward.1} parent=31 // pred_fallthru
          _
        // Predicated region
        $region65: #{encoder_forward.1} parent=31 // pred_check
          %p596 = pneg %p318
        $region66: #{encoder_forward.1} parent=31 // pred_check_branch
          %598 = sbr.rel (%p596) target = $region68
        $region67: #{encoder_forward.1} parent=31 // pred_region
          %p599 = scmp.lt.s32.totalorder %s39, 1
          %s600 = scalar_select %p599, %s39, 1
          %s601 = smul.addr %s600, 4
          %s602 = smul.addr %s601, 4
          %s603 = scalar_lea.vmem %s10, %s602
        $region68: #{encoder_forward.1} parent=31 // pred_fallthru
          _
        // Predicated region
        $region69: #{encoder_forward.1} parent=31 // pred_check
          %p604 = pneg %p344
        $region70: #{encoder_forward.1} parent=31 // pred_check_branch
          %606 = sbr.rel (%p604) target = $region72
        $region71: #{encoder_forward.1} parent=31 // pred_region
          %s607 = sand.u32 %s31, 1
          %s608 = scalar_lea.sflag [#allocation9], %s607
          %s609 = sand.u32 %s334, 1
          %s610 = scalar_lea.vmem [#allocation8], %s609
          %s612 = ssub.s32 16, 16
          %613 = vsyncadd %s608, %s612
          %s614 = smul.addr %s39, 16
          %s615 = scalar_lea.hbm %s11, %s614
          %s617 = sshll.u32 %s610, 4
          %s618 = int_to_ptr.vmem [resolvable:$true] %s617
          %620 = dma.hbm_to_vmem [thread:$0]  %s615, 16, %s618, %s608
        $region72: #{encoder_forward.1} parent=31 // pred_fallthru
          _
        // Predicated region
        $region73: #{encoder_forward.1} parent=31 // pred_check
          %p621 = pneg %p370
        $region74: #{encoder_forward.1} parent=31 // pred_check_branch
          %623 = sbr.rel (%p621) target = $region76
        $region75: #{encoder_forward.1} parent=31 // pred_region
          %p624 = scmp.lt.s32.totalorder %s39, 1
          %s625 = scalar_select %p624, %s39, 1
          %s626 = smul.addr %s625, 8
          %s627 = smul.addr %s626, 4
          %s628 = scalar_lea.vmem %s12, %s627
        $region76: #{encoder_forward.1} parent=31 // pred_fallthru
          _
        // Predicated region
        $region77: #{encoder_forward.1} parent=31 // pred_check
          %p629 = pneg %p396
        $region78: #{encoder_forward.1} parent=31 // pred_check_branch
          %631 = sbr.rel (%p629) target = $region80
        $region79: #{encoder_forward.1} parent=31 // pred_region
          %s632 = sand.u32 %s31, 1
          %s633 = scalar_lea.sflag [#allocation9], %s632
          %s634 = sand.u32 %s386, 1
          %s635 = scalar_lea.vmem [#allocation10], %s634
          %s637 = ssub.s32 16, 16
          %638 = vsyncadd %s633, %s637
          %s639 = smul.addr %s39, 16
          %s640 = scalar_lea.hbm %s13, %s639
          %s642 = sshll.u32 %s635, 4
          %s643 = int_to_ptr.vmem [resolvable:$true] %s642
          %645 = dma.hbm_to_vmem [thread:$0]  %s640, 16, %s643, %s633
        $region80: #{encoder_forward.1} parent=31 // pred_fallthru
          _
      $region32: #{encoder_forward.1} parent=5 // pred_fallthru
        _
      %p646 = scmp.le.s32.totalorder 1, %s31
      %p647 = scmp.lt.s32.totalorder %s31, 3
      %p648 = pnand %p646, %p647
      %p649 = pneg %p648
      // Predicated region
      $region81: #{encoder_forward.1} parent=5 // pred_check
        _
      $region82: #{encoder_forward.1} parent=5 // pred_check_branch
        %651 = sbr.rel (%p648) target = $region84
      $region83: #{encoder_forward.1} parent=5 // pred_region
        %s652 = ssub.s32 %s31, 1
        // Predicated region
        $region85: #{encoder_forward.1} parent=83 // pred_check
          %p653 = pneg %p69
        $region86: #{encoder_forward.1} parent=83 // pred_check_branch
          %655 = sbr.rel (%p653) target = $region88
        $region87: #{encoder_forward.1} parent=83 // pred_region
          %656 = dma.done [#allocation3], 256
        $region88: #{encoder_forward.1} parent=83 // pred_fallthru
          _
        %s657 = sand.u32 %s36, 1
        %s658 = scalar_lea.sflag [#allocation6], %s657
        %s659 = sand.u32 %s233, 1
        %s660 = scalar_lea.vmem [#allocation5], %s659
        // Predicated region
        $region89: #{encoder_forward.1} parent=83 // pred_check
          %p661 = pneg %p246
        $region90: #{encoder_forward.1} parent=83 // pred_check_branch
          %663 = sbr.rel (%p661) target = $region92
        $region91: #{encoder_forward.1} parent=83 // pred_region
          %664 = dma.done %s658, 16
        $region92: #{encoder_forward.1} parent=83 // pred_fallthru
          _
        %s665 = sand.u32 %s36, 1
        %s666 = scalar_lea.sflag [#allocation6], %s665
        %s667 = sand.u32 %s285, 1
        %s668 = scalar_lea.vmem [#allocation7], %s667
        // Predicated region
        $region93: #{encoder_forward.1} parent=83 // pred_check
          %p669 = pneg %p298
        $region94: #{encoder_forward.1} parent=83 // pred_check_branch
          %671 = sbr.rel (%p669) target = $region96
        $region95: #{encoder_forward.1} parent=83 // pred_region
          %672 = dma.done %s666, 16
        $region96: #{encoder_forward.1} parent=83 // pred_fallthru
          _
        %s673 = sand.u32 %s36, 1
        %s674 = scalar_lea.sflag [#allocation9], %s673
        %s675 = sand.u32 %s337, 1
        %s676 = scalar_lea.vmem [#allocation8], %s675
        // Predicated region
        $region97: #{encoder_forward.1} parent=83 // pred_check
          %p677 = pneg %p350
        $region98: #{encoder_forward.1} parent=83 // pred_check_branch
          %679 = sbr.rel (%p677) target = $region100
        $region99: #{encoder_forward.1} parent=83 // pred_region
          %680 = dma.done %s674, 16
        $region100: #{encoder_forward.1} parent=83 // pred_fallthru
          _
        %s681 = sand.u32 %s36, 1
        %s682 = scalar_lea.sflag [#allocation9], %s681
        %s683 = sand.u32 %s389, 1
        %s684 = scalar_lea.vmem [#allocation10], %s683
        // Predicated region
        $region101: #{encoder_forward.1} parent=83 // pred_check
          %p685 = pneg %p402
        $region102: #{encoder_forward.1} parent=83 // pred_check_branch
          %687 = sbr.rel (%p685) target = $region104
        $region103: #{encoder_forward.1} parent=83 // pred_region
          %688 = dma.done %s682, 16
        $region104: #{encoder_forward.1} parent=83 // pred_fallthru
          _
        // Predicated region
        $region105: #{encoder_forward.1} parent=83 // pred_check
          %p689 = pneg %p444
        $region106: #{encoder_forward.1} parent=83 // pred_check_branch
          %691 = sbr.rel (%p689) target = $region108
        $region107: #{encoder_forward.1} parent=83 // pred_region
          %692 = dma.done [#allocation12], 16
        $region108: #{encoder_forward.1} parent=83 // pred_fallthru
          _
        %p693 = pneg %p69
        %p694 = pneg %p66
        %p695 = pneg %p90
        %p696 = pneg %p87
        %p697 = scmp.lt.s32.totalorder %s41, 1
        %s698 = scalar_select %p697, %s41, 1
        %s699 = scalar_lea.vmem %s2, %s698
        %p700 = pneg %p116
        %p701 = pneg %p113
        %p702 = scmp.lt.s32.totalorder %s41, 1
        %s703 = scalar_select %p702, %s41, 1
        %s704 = scalar_lea.vmem %s3, %s703
        %p705 = pneg %p142
        %p706 = pneg %p139
        %p707 = scmp.lt.s32.totalorder %s41, 1
        %s708 = scalar_select %p707, %s41, 1
        %s709 = smul.addr %s708, 4
        %s710 = smul.addr %s709, 4
        %s711 = scalar_lea.vmem %s4, %s710
        %p712 = pneg %p168
        %p713 = pneg %p165
        %p714 = scmp.lt.s32.totalorder %s41, 1
        %s715 = scalar_select %p714, %s41, 1
        %s716 = scalar_lea.vmem %s5, %s715
        %p717 = pneg %p194
        %p718 = pneg %p191
        %p719 = scmp.lt.s32.totalorder %s41, 1
        %s720 = scalar_select %p719, %s41, 1
        %s721 = smul.addr %s720, 4
        %s722 = smul.addr %s721, 4
        %s723 = scalar_lea.vmem %s6, %s722
        %p724 = pneg %p220
        %p725 = pneg %p217
        %s726 = sand.u32 %s36, 1
        %s727 = scalar_lea.sflag [#allocation6], %s726
        %s728 = sand.u32 %s233, 1
        %s729 = scalar_lea.vmem [#allocation5], %s728
        %p730 = pneg %p246
        %p731 = pneg %p243
        %p732 = scmp.lt.s32.totalorder %s41, 1
        %s733 = scalar_select %p732, %s41, 1
        %s734 = scalar_lea.vmem %s8, %s733
        %p735 = pneg %p272
        %p736 = pneg %p269
        %s737 = sand.u32 %s36, 1
        %s738 = scalar_lea.sflag [#allocation6], %s737
        %s739 = sand.u32 %s285, 1
        %s740 = scalar_lea.vmem [#allocation7], %s739
        %p741 = pneg %p298
        %p742 = pneg %p295
        %p743 = scmp.lt.s32.totalorder %s41, 1
        %s744 = scalar_select %p743, %s41, 1
        %s745 = smul.addr %s744, 4
        %s746 = smul.addr %s745, 4
        %s747 = scalar_lea.vmem %s10, %s746
        %p748 = pneg %p324
        %p749 = pneg %p321
        %s750 = sand.u32 %s36, 1
        %s751 = scalar_lea.sflag [#allocation9], %s750
        %s752 = sand.u32 %s337, 1
        %s753 = scalar_lea.vmem [#allocation8], %s752
        %p754 = pneg %p350
        %p755 = pneg %p347
        %p756 = scmp.lt.s32.totalorder %s41, 1
        %s757 = scalar_select %p756, %s41, 1
        %s758 = smul.addr %s757, 8
        %s759 = smul.addr %s758, 4
        %s760 = scalar_lea.vmem %s12, %s759
        %p761 = pneg %p376
        %p762 = pneg %p373
        %s763 = sand.u32 %s36, 1
        %s764 = scalar_lea.sflag [#allocation9], %s763
        %s765 = sand.u32 %s389, 1
        %s766 = scalar_lea.vmem [#allocation10], %s765
        %p767 = pneg %p402
        %p768 = pneg %p399
        %p769 = pneg %p423
        %p770 = pneg %p420
        %p771 = pneg %p444
        %p772 = pneg %p441
        %p773 = pneg %p470
        %p774 = pneg %p467
        %s775 = smul.u32 2, %s40
        %p776 = scmp.lt.s32.totalorder %s41, 1
        %s777 = scalar_select %p776, %s41, 1
        %s778 = scalar_lea.vmem %s2, %s777
        %p779 = scmp.lt.s32.totalorder %s41, 1
        %s780 = scalar_select %p779, %s41, 1
        %s781 = scalar_lea.vmem %s3, %s780
        %p782 = scmp.lt.s32.totalorder %s41, 1
        %s783 = scalar_select %p782, %s41, 1
        %s784 = smul.addr %s783, 4
        %s785 = smul.addr %s784, 4
        %s786 = scalar_lea.vmem %s4, %s785
        %p787 = scmp.lt.s32.totalorder %s41, 1
        %s788 = scalar_select %p787, %s41, 1
        %s789 = scalar_lea.vmem %s5, %s788
        %p790 = scmp.lt.s32.totalorder %s41, 1
        %s791 = scalar_select %p790, %s41, 1
        %s792 = smul.addr %s791, 4
        %s793 = smul.addr %s792, 4
        %s794 = scalar_lea.vmem %s6, %s793
        %p795 = scmp.lt.s32.totalorder %s41, 1
        %s796 = scalar_select %p795, %s41, 1
        %s797 = scalar_lea.vmem %s8, %s796
        %p798 = scmp.lt.s32.totalorder %s41, 1
        %s799 = scalar_select %p798, %s41, 1
        %s800 = smul.addr %s799, 4
        %s801 = smul.addr %s800, 4
        %s802 = scalar_lea.vmem %s10, %s801
        %p803 = scmp.lt.s32.totalorder %s41, 1
        %s804 = scalar_select %p803, %s41, 1
        %s805 = smul.addr %s804, 8
        %s806 = smul.addr %s805, 4
        %s807 = scalar_lea.vmem %s12, %s806
        %s808 = smul.u32 2, %s40
        %p810 = scmp.eq.s32.totalorder %s41, 0
        // Predicated region
        $region109: #{encoder_forward.1} parent=83 // pred_check
          %p811 = pneg %p810
        $region110: #{encoder_forward.1} parent=83 // pred_check_branch
          %813 = sbr.rel (%p811) target = $region112
        $region111: #{encoder_forward.1} parent=83 // pred_region
          %v814 = vld [vmem:[#allocation2] sm:$0xff]
          %v815 = vld [vmem:[#allocation2 + $0x8] sm:$0xff]
          %v816 = vld [vmem:[%s1] sm:$0xff]
          %v817 = vadd.f32 %v814, %v816
          %v818 = vadd.f32 %v815, %v816
          %vm819 = vcmask 261120
          %820 = vst.msk [vmem:[#allocation13] sm:$0xff] %vm819, %v817
          %821 = vst.msk [vmem:[#allocation13 + $0x8] sm:$0xff] %vm819, %v818
        $region112: #{encoder_forward.1} parent=83 // pred_fallthru
          _
        %v822 = vld [vmem:[#allocation13] sm:$0xff]
        %v823 = vld [vmem:[#allocation13 + $0x8] sm:$0xff]
        %v824 = vld [vmem:[%s778] sm:$0x1]
        %v825 = vld [vmem:[%s781] sm:$0x1]
        %vm826 = vcmask 261120
        %v827 = vsel %vm826, %v822, 0.0
        %828 = vadd.xlane.f32.xlu0 %v827
        %v829 = vpop.xlane.xlu0 %828
        %v830 = vsel %vm826, %v823, 0.0
        %831 = vadd.xlane.f32.xlu0 %v830
        %v832 = vpop.xlane.xlu0 %831
        %v833 = vrcp.pop 32.0
        %v834 = vmul.f32 %v829, %v833
        %v835 = vmul.f32 %v832, %v833
        %v836 = vsub.f32 %v822, %v834
        %v837 = vsub.f32 %v823, %v835
        %v838 = vmul.f32 %v836, %v836
        %v839 = vmul.f32 %v837, %v837
        %v840 = vsel %vm826, %v838, 0.0
        %841 = vadd.xlane.f32.xlu0 %v840
        %v842 = vpop.xlane.xlu0 %841
        %v843 = vsel %vm826, %v839, 0.0
        %844 = vadd.xlane.f32.xlu0 %v843
        %v845 = vpop.xlane.xlu0 %844
        %v846 = vmul.f32 %v842, %v833
        %v847 = vmul.f32 %v845, %v833
        %v848 = vadd.f32 %v846, 1e-06
        %v849 = vadd.f32 %v847, 1e-06
        %v850 = vrsqrt.pop %v848
        %v851 = vrsqrt.pop %v849
        %v852 = vmul.f32 %v836, %v850
        %v853 = vmul.f32 %v837, %v851
        %v855 = vlaneseq
        %v856 = vshrl.u32 %v855, 7
        %v857 = vsub.s32 0, %v856
        %v858 = vrot.slane %v824, %v857
        %v860 = vmul.f32 %v852, %v858
        %v861 = vmul.f32 %v853, %v858
        %v863 = vlaneseq
        %v864 = vshrl.u32 %v863, 7
        %v865 = vsub.s32 0, %v864
        %v866 = vrot.slane %v825, %v865
        %v868 = vadd.f32 %v860, %v866
        %v869 = vadd.f32 %v861, %v866
        %v870 = vpack.c.bf16 %v869, %v868
        %v871 = vld [vmem:[%s786] sm:$0xf]
        %v872 = vld [vmem:[%s786 + $0x4] sm:$0xf]
        %v873 = vld [vmem:[%s786 + $0x8] sm:$0xf]
        %v874 = vld [vmem:[%s786 + $0xc] sm:$0xf]
        %v875 = vld [vmem:[%s789] sm:$0x1]
        %v877 = vlaneseq
        %v878 = vshrl.u32 %v877, 7
        %v879 = vsub.s32 0, %v878
        %v880 = vrot.slane %v875, %v879
        %v886 = vunpack.c.l.b16 %v871
        %v887 = vunpack.c.l.b16 %v872
        %v888 = vunpack.c.l.b16 %v873
        %v889 = vunpack.c.l.b16 %v874
        %v890 = vpack.c.b16 %v887, %v886
        %v891 = vpack.c.b16 %v889, %v888
        %v895 = vsel %vm826, %v870, 0
        %897 = vmatprep.subr.bf16.mxu0 0
        %898 = vmatpush1.bf16.msra.mxu0 %v890
        %899 = vmatprep.subr.bf16.mxu0 0
        %900 = vmatpush1.bf16.msra.mxu0 %v891
        %901 = vmatprep.subr.bf16.mxu0 0
        %902 = vmatpush1.bf16.msra.mxu0 0
        %903 = vmatprep.subr.bf16.mxu0 0
        %904 = vmatpush1.bf16.msra.mxu0 0
        %905 = vmatprep.subr.bf16.mxu0 0
        %906 = vmatpush1.bf16.msra.mxu0 0
        %907 = vmatprep.subr.bf16.mxu0 0
        %908 = vmatpush1.bf16.msra.mxu0 0
        %909 = vmatprep.subr.bf16.mxu0 0
        %910 = vmatpush1.bf16.msra.mxu0 0
        %911 = vmatprep.subr.bf16.mxu0 0
        %912 = vmatpush1.bf16.msra.mxu0 0
        %913 = vmatprep.subr.bf16.mxu0 0
        %914 = vmatpush1.bf16.msra.mxu0 0
        %915 = vmatprep.subr.bf16.mxu0 0
        %916 = vmatpush1.bf16.msra.mxu0 0
        %917 = vmatprep.subr.bf16.mxu0 0
        %918 = vmatpush1.bf16.msra.mxu0 0
        %919 = vmatprep.subr.bf16.mxu0 0
        %920 = vmatpush1.bf16.msra.mxu0 0
        %921 = vmatprep.subr.bf16.mxu0 0
        %922 = vmatpush1.bf16.msra.mxu0 0
        %923 = vmatprep.subr.bf16.mxu0 0
        %924 = vmatpush1.bf16.msra.mxu0 0
        %925 = vmatprep.subr.bf16.mxu0 0
        %926 = vmatpush1.bf16.msra.mxu0 0
        %927 = vmatprep.subr.bf16.mxu0 0
        %928 = vmatpush1.bf16.msra.mxu0 0
        %929 = vmatprep.mubr.bf16.mxu0 0
        %930 = vmatmul.mubr.bf16.gmra.mrb[0].mxu0 %v895
        %v931 = vpop.f32.mrb[0].mxu0
        %v932 = vadd.f32 %v880, %v931
        %v933 = vpop.f32.mrb[0].mxu0
        %v934 = vpop.f32.mrb[0].mxu0
        %v935 = vadd.f32 %v880, %v934
        %v936 = vpop.f32.mrb[0].mxu0
        %937 = vdwg.mxu0
        %940 = vrot.lane.b32.xlu0 %v932, 120
        %v941 = vpop.permute.xlu0 %940
        %942 = vrot.lane.b32.xlu0 %v935, 120
        %v943 = vpop.permute.xlu0 %942
        %946 = vrot.lane.b32.xlu0 %v932, 112
        %v947 = vpop.permute.xlu0 %946
        %948 = vrot.lane.b32.xlu0 %v935, 112
        %v949 = vpop.permute.xlu0 %948
        %952 = vrot.lane.b32.xlu0 %v932, 104
        %v953 = vpop.permute.xlu0 %952
        %954 = vrot.lane.b32.xlu0 %v935, 104
        %v955 = vpop.permute.xlu0 %954
        %v958 = vpack.c.bf16 %v932, %v932
        %v959 = vpack.c.bf16 %v935, %v935
        %v960 = vpack.c.bf16 %v941, %v941
        %v961 = vpack.c.bf16 %v943, %v943
        %v962 = vpack.c.bf16 %v947, %v947
        %v963 = vpack.c.bf16 %v949, %v949
        %v964 = vpack.c.bf16 %v953, %v953
        %v965 = vpack.c.bf16 %v955, %v955
        %967 = vrot.lane.b32.xlu0 %v958, 96
        %v968 = vpop.permute.xlu0 %967
        %vm969 = vcmask 64512
        %v971 = vsel %vm969, %v958, 0
        %v974 = vsel %vm969, %v968, 0
        %976 = vmatprep.subr.bf16.mxu0 0
        %977 = vmatpush1.bf16.xpose.msra.mxu0 %v974
        %978 = vmatprep.subr.bf16.mxu0 0
        %979 = vmatpush1.bf16.xpose.msra.mxu0 0
        %980 = vmatprep.subr.bf16.mxu0 0
        %981 = vmatpush1.bf16.xpose.msra.mxu0 0
        %982 = vmatprep.subr.bf16.mxu0 0
        %983 = vmatpush1.bf16.xpose.msra.mxu0 0
        %984 = vmatprep.subr.bf16.mxu0 0
        %985 = vmatpush1.bf16.xpose.msra.mxu0 0
        %986 = vmatprep.subr.bf16.mxu0 0
        %987 = vmatpush1.bf16.xpose.msra.mxu0 0
        %988 = vmatprep.subr.bf16.mxu0 0
        %989 = vmatpush1.bf16.xpose.msra.mxu0 0
        %990 = vmatprep.subr.bf16.mxu0 0
        %991 = vmatpush1.bf16.xpose.msra.mxu0 0
        %992 = vmatprep.subr.bf16.mxu0 0
        %993 = vmatpush1.bf16.xpose.msra.mxu0 0
        %994 = vmatprep.subr.bf16.mxu0 0
        %995 = vmatpush1.bf16.xpose.msra.mxu0 0
        %996 = vmatprep.subr.bf16.mxu0 0
        %997 = vmatpush1.bf16.xpose.msra.mxu0 0
        %998 = vmatprep.subr.bf16.mxu0 0
        %999 = vmatpush1.bf16.xpose.msra.mxu0 0
        %1000 = vmatprep.subr.bf16.mxu0 0
        %1001 = vmatpush1.bf16.xpose.msra.mxu0 0
        %1002 = vmatprep.subr.bf16.mxu0 0
        %1003 = vmatpush1.bf16.xpose.msra.mxu0 0
        %1004 = vmatprep.subr.bf16.mxu0 0
        %1005 = vmatpush1.bf16.xpose.msra.mxu0 0
        %1006 = vmatprep.subr.bf16.mxu0 0
        %1007 = vmatpush1.bf16.xpose.msra.mxu0 0
        %1008 = vmatprep.mubr.bf16.mxu0 0
        %1009 = vmatmul.mubr.bf16.gmra.mrb[0].mxu0 %v971
        %v1010 = vpop.f32.mrb[0].mxu0
        %v1011 = vadd.f32 0.0, %v1010
        %v1012 = vpop.f32.mrb[0].mxu0
        %v1013 = vpop.f32.mrb[0].mxu0
        %v1014 = vpop.f32.mrb[0].mxu0
        %1015 = vdwg.mxu0
        %1017 = vrot.lane.b32.xlu0 %v959, 96
        %v1018 = vpop.permute.xlu0 %1017
        %v1020 = vsel %vm969, %v959, 0
        %v1023 = vsel %vm969, %v1018, 0
        %1025 = vmatprep.subr.bf16.mxu0 0
        %1026 = vmatpush1.bf16.xpose.msra.mxu0 %v1023
        %1027 = vmatprep.subr.bf16.mxu0 0
        %1028 = vmatpush1.bf16.xpose.msra.mxu0 0
        %1029 = vmatprep.subr.bf16.mxu0 0
        %1030 = vmatpush1.bf16.xpose.msra.mxu0 0
        %1031 = vmatprep.subr.bf16.mxu0 0
        %1032 = vmatpush1.bf16.xpose.msra.mxu0 0
        %1033 = vmatprep.subr.bf16.mxu0 0
        %1034 = vmatpush1.bf16.xpose.msra.mxu0 0
        %1035 = vmatprep.subr.bf16.mxu0 0
        %1036 = vmatpush1.bf16.xpose.msra.mxu0 0
        %1037 = vmatprep.subr.bf16.mxu0 0
        %1038 = vmatpush1.bf16.xpose.msra.mxu0 0
        %1039 = vmatprep.subr.bf16.mxu0 0
        %1040 = vmatpush1.bf16.xpose.msra.mxu0 0
        %1041 = vmatprep.subr.bf16.mxu0 0
        %1042 = vmatpush1.bf16.xpose.msra.mxu0 0
        %1043 = vmatprep.subr.bf16.mxu0 0
        %1044 = vmatpush1.bf16.xpose.msra.mxu0 0
        %1045 = vmatprep.subr.bf16.mxu0 0
        %1046 = vmatpush1.bf16.xpose.msra.mxu0 0
        %1047 = vmatprep.subr.bf16.mxu0 0
        %1048 = vmatpush1.bf16.xpose.msra.mxu0 0
        %1049 = vmatprep.subr.bf16.mxu0 0
        %1050 = vmatpush1.bf16.xpose.msra.mxu0 0
        %1051 = vmatprep.subr.bf16.mxu0 0
        %1052 = vmatpush1.bf16.xpose.msra.mxu0 0
        %1053 = vmatprep.subr.bf16.mxu0 0
        %1054 = vmatpush1.bf16.xpose.msra.mxu0 0
        %1055 = vmatprep.subr.bf16.mxu0 0
        %1056 = vmatpush1.bf16.xpose.msra.mxu0 0
        %1057 = vmatprep.mubr.bf16.mxu0 0
        %1058 = vmatmul.mubr.bf16.gmra.mrb[0].mxu0 %v1020
        %v1059 = vpop.f32.mrb[0].mxu0
        %v1060 = vadd.f32 0.0, %v1059
        %v1061 = vpop.f32.mrb[0].mxu0
        %v1062 = vpop.f32.mrb[0].mxu0
        %v1063 = vpop.f32.mrb[0].mxu0
        %1064 = vdwg.mxu0
        %1066 = vrot.lane.b32.xlu0 %v960, 96
        %v1067 = vpop.permute.xlu0 %1066
        %v1069 = vsel %vm969, %v960, 0
        %v1072 = vsel %vm969, %v1067, 0
        %1074 = vmatprep.subr.bf16.mxu0 0
        %1075 = vmatpush1.bf16.xpose.msra.mxu0 %v1072
        %1076 = vmatprep.subr.bf16.mxu0 0
        %1077 = vmatpush1.bf16.xpose.msra.mxu0 0
        %1078 = vmatprep.subr.bf16.mxu0 0
        %1079 = vmatpush1.bf16.xpose.msra.mxu0 0
        %1080 = vmatprep.subr.bf16.mxu0 0
        %1081 = vmatpush1.bf16.xpose.msra.mxu0 0
        %1082 = vmatprep.subr.bf16.mxu0 0
        %1083 = vmatpush1.bf16.xpose.msra.mxu0 0
        %1084 = vmatprep.subr.bf16.mxu0 0
        %1085 = vmatpush1.bf16.xpose.msra.mxu0 0
        %1086 = vmatprep.subr.bf16.mxu0 0
        %1087 = vmatpush1.bf16.xpose.msra.mxu0 0
        %1088 = vmatprep.subr.bf16.mxu0 0
        %1089 = vmatpush1.bf16.xpose.msra.mxu0 0
        %1090 = vmatprep.subr.bf16.mxu0 0
        %1091 = vmatpush1.bf16.xpose.msra.mxu0 0
        %1092 = vmatprep.subr.bf16.mxu0 0
        %1093 = vmatpush1.bf16.xpose.msra.mxu0 0
        %1094 = vmatprep.subr.bf16.mxu0 0
        %1095 = vmatpush1.bf16.xpose.msra.mxu0 0
        %1096 = vmatprep.subr.bf16.mxu0 0
        %1097 = vmatpush1.bf16.xpose.msra.mxu0 0
        %1098 = vmatprep.subr.bf16.mxu0 0
        %1099 = vmatpush1.bf16.xpose.msra.mxu0 0
        %1100 = vmatprep.subr.bf16.mxu0 0
        %1101 = vmatpush1.bf16.xpose.msra.mxu0 0
        %1102 = vmatprep.subr.bf16.mxu0 0
        %1103 = vmatpush1.bf16.xpose.msra.mxu0 0
        %1104 = vmatprep.subr.bf16.mxu0 0
        %1105 = vmatpush1.bf16.xpose.msra.mxu0 0
        %1106 = vmatprep.mubr.bf16.mxu0 0
        %1107 = vmatmul.mubr.bf16.gmra.mrb[0].mxu0 %v1069
        %v1108 = vpop.f32.mrb[0].mxu0
        %v1109 = vadd.f32 0.0, %v1108
        %v1110 = vpop.f32.mrb[0].mxu0
        %v1111 = vpop.f32.mrb[0].mxu0
        %v1112 = vpop.f32.mrb[0].mxu0
        %1113 = vdwg.mxu0
        %1115 = vrot.lane.b32.xlu0 %v961, 96
        %v1116 = vpop.permute.xlu0 %1115
        %v1118 = vsel %vm969, %v961, 0
        %v1121 = vsel %vm969, %v1116, 0
        %1123 = vmatprep.subr.bf16.mxu0 0
        %1124 = vmatpush1.bf16.xpose.msra.mxu0 %v1121
        %1125 = vmatprep.subr.bf16.mxu0 0
        %1126 = vmatpush1.bf16.xpose.msra.mxu0 0
        %1127 = vmatprep.subr.bf16.mxu0 0
        %1128 = vmatpush1.bf16.xpose.msra.mxu0 0
        %1129 = vmatprep.subr.bf16.mxu0 0
        %1130 = vmatpush1.bf16.xpose.msra.mxu0 0
        %1131 = vmatprep.subr.bf16.mxu0 0
        %1132 = vmatpush1.bf16.xpose.msra.mxu0 0
        %1133 = vmatprep.subr.bf16.mxu0 0
        %1134 = vmatpush1.bf16.xpose.msra.mxu0 0
        %1135 = vmatprep.subr.bf16.mxu0 0
        %1136 = vmatpush1.bf16.xpose.msra.mxu0 0
        %1137 = vmatprep.subr.bf16.mxu0 0
        %1138 = vmatpush1.bf16.xpose.msra.mxu0 0
        %1139 = vmatprep.subr.bf16.mxu0 0
        %1140 = vmatpush1.bf16.xpose.msra.mxu0 0
        %1141 = vmatprep.subr.bf16.mxu0 0
        %1142 = vmatpush1.bf16.xpose.msra.mxu0 0
        %1143 = vmatprep.subr.bf16.mxu0 0
        %1144 = vmatpush1.bf16.xpose.msra.mxu0 0
        %1145 = vmatprep.subr.bf16.mxu0 0
        %1146 = vmatpush1.bf16.xpose.msra.mxu0 0
        %1147 = vmatprep.subr.bf16.mxu0 0
        %1148 = vmatpush1.bf16.xpose.msra.mxu0 0
        %1149 = vmatprep.subr.bf16.mxu0 0
        %1150 = vmatpush1.bf16.xpose.msra.mxu0 0
        %1151 = vmatprep.subr.bf16.mxu0 0
        %1152 = vmatpush1.bf16.xpose.msra.mxu0 0
        %1153 = vmatprep.subr.bf16.mxu0 0
        %1154 = vmatpush1.bf16.xpose.msra.mxu0 0
        %1155 = vmatprep.mubr.bf16.mxu0 0
        %1156 = vmatmul.mubr.bf16.gmra.mrb[0].mxu0 %v1118
        %v1157 = vpop.f32.mrb[0].mxu0
        %v1158 = vadd.f32 0.0, %v1157
        %v1159 = vpop.f32.mrb[0].mxu0
        %v1160 = vpop.f32.mrb[0].mxu0
        %v1161 = vpop.f32.mrb[0].mxu0
        %1162 = vdwg.mxu0
        %1164 = vrot.lane.b32.xlu0 %v962, 96
        %v1165 = vpop.permute.xlu0 %1164
        %v1167 = vsel %vm969, %v962, 0
        %v1170 = vsel %vm969, %v1165, 0
        %1172 = vmatprep.subr.bf16.mxu0 0
        %1173 = vmatpush1.bf16.xpose.msra.mxu0 %v1170
        %1174 = vmatprep.subr.bf16.mxu0 0
        %1175 = vmatpush1.bf16.xpose.msra.mxu0 0
        %1176 = vmatprep.subr.bf16.mxu0 0
        %1177 = vmatpush1.bf16.xpose.msra.mxu0 0
        %1178 = vmatprep.subr.bf16.mxu0 0
        %1179 = vmatpush1.bf16.xpose.msra.mxu0 0
        %1180 = vmatprep.subr.bf16.mxu0 0
        %1181 = vmatpush1.bf16.xpose.msra.mxu0 0
        %1182 = vmatprep.subr.bf16.mxu0 0
        %1183 = vmatpush1.bf16.xpose.msra.mxu0 0
        %1184 = vmatprep.subr.bf16.mxu0 0
        %1185 = vmatpush1.bf16.xpose.msra.mxu0 0
        %1186 = vmatprep.subr.bf16.mxu0 0
        %1187 = vmatpush1.bf16.xpose.msra.mxu0 0
        %1188 = vmatprep.subr.bf16.mxu0 0
        %1189 = vmatpush1.bf16.xpose.msra.mxu0 0
        %1190 = vmatprep.subr.bf16.mxu0 0
        %1191 = vmatpush1.bf16.xpose.msra.mxu0 0
        %1192 = vmatprep.subr.bf16.mxu0 0
        %1193 = vmatpush1.bf16.xpose.msra.mxu0 0
        %1194 = vmatprep.subr.bf16.mxu0 0
        %1195 = vmatpush1.bf16.xpose.msra.mxu0 0
        %1196 = vmatprep.subr.bf16.mxu0 0
        %1197 = vmatpush1.bf16.xpose.msra.mxu0 0
        %1198 = vmatprep.subr.bf16.mxu0 0
        %1199 = vmatpush1.bf16.xpose.msra.mxu0 0
        %1200 = vmatprep.subr.bf16.mxu0 0
        %1201 = vmatpush1.bf16.xpose.msra.mxu0 0
        %1202 = vmatprep.subr.bf16.mxu0 0
        %1203 = vmatpush1.bf16.xpose.msra.mxu0 0
        %1204 = vmatprep.mubr.bf16.mxu0 0
        %1205 = vmatmul.mubr.bf16.gmra.mrb[0].mxu0 %v1167
        %v1206 = vpop.f32.mrb[0].mxu0
        %v1207 = vadd.f32 0.0, %v1206
        %v1208 = vpop.f32.mrb[0].mxu0
        %v1209 = vpop.f32.mrb[0].mxu0
        %v1210 = vpop.f32.mrb[0].mxu0
        %1211 = vdwg.mxu0
        %1213 = vrot.lane.b32.xlu0 %v963, 96
        %v1214 = vpop.permute.xlu0 %1213
        %v1216 = vsel %vm969, %v963, 0
        %v1219 = vsel %vm969, %v1214, 0
        %1221 = vmatprep.subr.bf16.mxu0 0
        %1222 = vmatpush1.bf16.xpose.msra.mxu0 %v1219
        %1223 = vmatprep.subr.bf16.mxu0 0
        %1224 = vmatpush1.bf16.xpose.msra.mxu0 0
        %1225 = vmatprep.subr.bf16.mxu0 0
        %1226 = vmatpush1.bf16.xpose.msra.mxu0 0
        %1227 = vmatprep.subr.bf16.mxu0 0
        %1228 = vmatpush1.bf16.xpose.msra.mxu0 0
        %1229 = vmatprep.subr.bf16.mxu0 0
        %1230 = vmatpush1.bf16.xpose.msra.mxu0 0
        %1231 = vmatprep.subr.bf16.mxu0 0
        %1232 = vmatpush1.bf16.xpose.msra.mxu0 0
        %1233 = vmatprep.subr.bf16.mxu0 0
        %1234 = vmatpush1.bf16.xpose.msra.mxu0 0
        %1235 = vmatprep.subr.bf16.mxu0 0
        %1236 = vmatpush1.bf16.xpose.msra.mxu0 0
        %1237 = vmatprep.subr.bf16.mxu0 0
        %1238 = vmatpush1.bf16.xpose.msra.mxu0 0
        %1239 = vmatprep.subr.bf16.mxu0 0
        %1240 = vmatpush1.bf16.xpose.msra.mxu0 0
        %1241 = vmatprep.subr.bf16.mxu0 0
        %1242 = vmatpush1.bf16.xpose.msra.mxu0 0
        %1243 = vmatprep.subr.bf16.mxu0 0
        %1244 = vmatpush1.bf16.xpose.msra.mxu0 0
        %1245 = vmatprep.subr.bf16.mxu0 0
        %1246 = vmatpush1.bf16.xpose.msra.mxu0 0
        %1247 = vmatprep.subr.bf16.mxu0 0
        %1248 = vmatpush1.bf16.xpose.msra.mxu0 0
        %1249 = vmatprep.subr.bf16.mxu0 0
        %1250 = vmatpush1.bf16.xpose.msra.mxu0 0
        %1251 = vmatprep.subr.bf16.mxu0 0
        %1252 = vmatpush1.bf16.xpose.msra.mxu0 0
        %1253 = vmatprep.mubr.bf16.mxu0 0
        %1254 = vmatmul.mubr.bf16.gmra.mrb[0].mxu0 %v1216
        %v1255 = vpop.f32.mrb[0].mxu0
        %v1256 = vadd.f32 0.0, %v1255
        %v1257 = vpop.f32.mrb[0].mxu0
        %v1258 = vpop.f32.mrb[0].mxu0
        %v1259 = vpop.f32.mrb[0].mxu0
        %1260 = vdwg.mxu0
        %1262 = vrot.lane.b32.xlu0 %v964, 96
        %v1263 = vpop.permute.xlu0 %1262
        %v1265 = vsel %vm969, %v964, 0
        %v1268 = vsel %vm969, %v1263, 0
        %1270 = vmatprep.subr.bf16.mxu0 0
        %1271 = vmatpush1.bf16.xpose.msra.mxu0 %v1268
        %1272 = vmatprep.subr.bf16.mxu0 0
        %1273 = vmatpush1.bf16.xpose.msra.mxu0 0
        %1274 = vmatprep.subr.bf16.mxu0 0
        %1275 = vmatpush1.bf16.xpose.msra.mxu0 0
        %1276 = vmatprep.subr.bf16.mxu0 0
        %1277 = vmatpush1.bf16.xpose.msra.mxu0 0
        %1278 = vmatprep.subr.bf16.mxu0 0
        %1279 = vmatpush1.bf16.xpose.msra.mxu0 0
        %1280 = vmatprep.subr.bf16.mxu0 0
        %1281 = vmatpush1.bf16.xpose.msra.mxu0 0
        %1282 = vmatprep.subr.bf16.mxu0 0
        %1283 = vmatpush1.bf16.xpose.msra.mxu0 0
        %1284 = vmatprep.subr.bf16.mxu0 0
        %1285 = vmatpush1.bf16.xpose.msra.mxu0 0
        %1286 = vmatprep.subr.bf16.mxu0 0
        %1287 = vmatpush1.bf16.xpose.msra.mxu0 0
        %1288 = vmatprep.subr.bf16.mxu0 0
        %1289 = vmatpush1.bf16.xpose.msra.mxu0 0
        %1290 = vmatprep.subr.bf16.mxu0 0
        %1291 = vmatpush1.bf16.xpose.msra.mxu0 0
        %1292 = vmatprep.subr.bf16.mxu0 0
        %1293 = vmatpush1.bf16.xpose.msra.mxu0 0
        %1294 = vmatprep.subr.bf16.mxu0 0
        %1295 = vmatpush1.bf16.xpose.msra.mxu0 0
        %1296 = vmatprep.subr.bf16.mxu0 0
        %1297 = vmatpush1.bf16.xpose.msra.mxu0 0
        %1298 = vmatprep.subr.bf16.mxu0 0
        %1299 = vmatpush1.bf16.xpose.msra.mxu0 0
        %1300 = vmatprep.subr.bf16.mxu0 0
        %1301 = vmatpush1.bf16.xpose.msra.mxu0 0
        %1302 = vmatprep.mubr.bf16.mxu0 0
        %1303 = vmatmul.mubr.bf16.gmra.mrb[0].mxu0 %v1265
        %v1304 = vpop.f32.mrb[0].mxu0
        %v1305 = vadd.f32 0.0, %v1304
        %v1306 = vpop.f32.mrb[0].mxu0
        %v1307 = vpop.f32.mrb[0].mxu0
        %v1308 = vpop.f32.mrb[0].mxu0
        %1309 = vdwg.mxu0
        %1311 = vrot.lane.b32.xlu0 %v965, 96
        %v1312 = vpop.permute.xlu0 %1311
        %v1314 = vsel %vm969, %v965, 0
        %v1317 = vsel %vm969, %v1312, 0
        %1319 = vmatprep.subr.bf16.mxu0 0
        %1320 = vmatpush1.bf16.xpose.msra.mxu0 %v1317
        %1321 = vmatprep.subr.bf16.mxu0 0
        %1322 = vmatpush1.bf16.xpose.msra.mxu0 0
        %1323 = vmatprep.subr.bf16.mxu0 0
        %1324 = vmatpush1.bf16.xpose.msra.mxu0 0
        %1325 = vmatprep.subr.bf16.mxu0 0
        %1326 = vmatpush1.bf16.xpose.msra.mxu0 0
        %1327 = vmatprep.subr.bf16.mxu0 0
        %1328 = vmatpush1.bf16.xpose.msra.mxu0 0
        %1329 = vmatprep.subr.bf16.mxu0 0
        %1330 = vmatpush1.bf16.xpose.msra.mxu0 0
        %1331 = vmatprep.subr.bf16.mxu0 0
        %1332 = vmatpush1.bf16.xpose.msra.mxu0 0
        %1333 = vmatprep.subr.bf16.mxu0 0
        %1334 = vmatpush1.bf16.xpose.msra.mxu0 0
        %1335 = vmatprep.subr.bf16.mxu0 0
        %1336 = vmatpush1.bf16.xpose.msra.mxu0 0
        %1337 = vmatprep.subr.bf16.mxu0 0
        %1338 = vmatpush1.bf16.xpose.msra.mxu0 0
        %1339 = vmatprep.subr.bf16.mxu0 0
        %1340 = vmatpush1.bf16.xpose.msra.mxu0 0
        %1341 = vmatprep.subr.bf16.mxu0 0
        %1342 = vmatpush1.bf16.xpose.msra.mxu0 0
        %1343 = vmatprep.subr.bf16.mxu0 0
        %1344 = vmatpush1.bf16.xpose.msra.mxu0 0
        %1345 = vmatprep.subr.bf16.mxu0 0
        %1346 = vmatpush1.bf16.xpose.msra.mxu0 0
        %1347 = vmatprep.subr.bf16.mxu0 0
        %1348 = vmatpush1.bf16.xpose.msra.mxu0 0
        %1349 = vmatprep.subr.bf16.mxu0 0
        %1350 = vmatpush1.bf16.xpose.msra.mxu0 0
        %1351 = vmatprep.mubr.bf16.mxu0 0
        %1352 = vmatmul.mubr.bf16.gmra.mrb[0].mxu0 %v1314
        %v1353 = vpop.f32.mrb[0].mxu0
        %v1354 = vadd.f32 0.0, %v1353
        %v1355 = vpop.f32.mrb[0].mxu0
        %v1356 = vpop.f32.mrb[0].mxu0
        %v1357 = vpop.f32.mrb[0].mxu0
        %1358 = vdwg.mxu0
        %v1359 = vsel %vm969, %v1011, -inf
        %1360 = vmax.xlane.f32.xlu0 %v1359
        %v1361 = vpop.xlane.xlu0 %1360
        %v1362 = vsel %vm969, %v1060, -inf
        %1363 = vmax.xlane.f32.xlu0 %v1362
        %v1364 = vpop.xlane.xlu0 %1363
        %v1365 = vsel %vm969, %v1109, -inf
        %1366 = vmax.xlane.f32.xlu0 %v1365
        %v1367 = vpop.xlane.xlu0 %1366
        %v1368 = vsel %vm969, %v1158, -inf
        %1369 = vmax.xlane.f32.xlu0 %v1368
        %v1370 = vpop.xlane.xlu0 %1369
        %v1371 = vsel %vm969, %v1207, -inf
        %1372 = vmax.xlane.f32.xlu0 %v1371
        %v1373 = vpop.xlane.xlu0 %1372
        %v1374 = vsel %vm969, %v1256, -inf
        %1375 = vmax.xlane.f32.xlu0 %v1374
        %v1376 = vpop.xlane.xlu0 %1375
        %v1377 = vsel %vm969, %v1305, -inf
        %1378 = vmax.xlane.f32.xlu0 %v1377
        %v1379 = vpop.xlane.xlu0 %1378
        %v1380 = vsel %vm969, %v1354, -inf
        %1381 = vmax.xlane.f32.xlu0 %v1380
        %v1382 = vpop.xlane.xlu0 %1381
        %v1383 = vsub.f32 %v1011, %v1361
        %v1384 = vsub.f32 %v1060, %v1364
        %v1385 = vsub.f32 %v1109, %v1367
        %v1386 = vsub.f32 %v1158, %v1370
        %v1387 = vsub.f32 %v1207, %v1373
        %v1388 = vsub.f32 %v1256, %v1376
        %v1389 = vsub.f32 %v1305, %v1379
        %v1390 = vsub.f32 %v1354, %v1382
        %v1391 = vmul.f32 %v1383, 1.442695
        %v1392 = vpow.pop %v1391
        %v1393 = vmul.f32 %v1384, 1.442695
        %v1394 = vpow.pop %v1393
        %v1395 = vmul.f32 %v1385, 1.442695
        %v1396 = vpow.pop %v1395
        %v1397 = vmul.f32 %v1386, 1.442695
        %v1398 = vpow.pop %v1397
        %v1399 = vmul.f32 %v1387, 1.442695
        %v1400 = vpow.pop %v1399
        %v1401 = vmul.f32 %v1388, 1.442695
        %v1402 = vpow.pop %v1401
        %v1403 = vmul.f32 %v1389, 1.442695
        %v1404 = vpow.pop %v1403
        %v1405 = vmul.f32 %v1390, 1.442695
        %v1406 = vpow.pop %v1405
        %v1407 = vsel %vm969, %v1392, 0.0
        %1408 = vadd.xlane.f32.xlu0 %v1407
        %v1409 = vpop.xlane.xlu0 %1408
        %v1410 = vsel %vm969, %v1394, 0.0
        %1411 = vadd.xlane.f32.xlu0 %v1410
        %v1412 = vpop.xlane.xlu0 %1411
        %v1413 = vsel %vm969, %v1396, 0.0
        %1414 = vadd.xlane.f32.xlu0 %v1413
        %v1415 = vpop.xlane.xlu0 %1414
        %v1416 = vsel %vm969, %v1398, 0.0
        %1417 = vadd.xlane.f32.xlu0 %v1416
        %v1418 = vpop.xlane.xlu0 %1417
        %v1419 = vsel %vm969, %v1400, 0.0
        %1420 = vadd.xlane.f32.xlu0 %v1419
        %v1421 = vpop.xlane.xlu0 %1420
        %v1422 = vsel %vm969, %v1402, 0.0
        %1423 = vadd.xlane.f32.xlu0 %v1422
        %v1424 = vpop.xlane.xlu0 %1423
        %v1425 = vsel %vm969, %v1404, 0.0
        %1426 = vadd.xlane.f32.xlu0 %v1425
        %v1427 = vpop.xlane.xlu0 %1426
        %v1428 = vsel %vm969, %v1406, 0.0
        %1429 = vadd.xlane.f32.xlu0 %v1428
        %v1430 = vpop.xlane.xlu0 %1429
        %v1431 = vrcp.pop %v1409
        %v1432 = vrcp.pop %v1412
        %v1433 = vrcp.pop %v1415
        %v1434 = vrcp.pop %v1418
        %v1435 = vrcp.pop %v1421
        %v1436 = vrcp.pop %v1424
        %v1437 = vrcp.pop %v1427
        %v1438 = vrcp.pop %v1430
        %v1439 = vmul.f32 %v1392, %v1431
        %v1440 = vmul.f32 %v1394, %v1432
        %v1441 = vmul.f32 %v1396, %v1433
        %v1442 = vmul.f32 %v1398, %v1434
        %v1443 = vmul.f32 %v1400, %v1435
        %v1444 = vmul.f32 %v1402, %v1436
        %v1445 = vmul.f32 %v1404, %v1437
        %v1446 = vmul.f32 %v1406, %v1438
        %v1447 = vpack.c.bf16 %v1439, %v1439
        %v1448 = vpack.c.bf16 %v1440, %v1440
        %v1449 = vpack.c.bf16 %v1441, %v1441
        %v1450 = vpack.c.bf16 %v1442, %v1442
        %v1451 = vpack.c.bf16 %v1443, %v1443
        %v1452 = vpack.c.bf16 %v1444, %v1444
        %v1453 = vpack.c.bf16 %v1445, %v1445
        %v1454 = vpack.c.bf16 %v1446, %v1446
        %1455 = vrot.lane.b32.xlu0 %v958, 64
        %v1456 = vpop.permute.xlu0 %1455
        %v1458 = vsel %vm969, %v1447, 0
        %vm1460 = vcmask 1043456
        %v1462 = vsel %vm1460, %v1456, 0
        %1464 = vmatprep.subr.bf16.mxu0 0
        %1465 = vmatpush1.bf16.msra.mxu0 %v1462
        %1466 = vmatprep.subr.bf16.mxu0 0
        %1467 = vmatpush1.bf16.msra.mxu0 0
        %1468 = vmatprep.subr.bf16.mxu0 0
        %1469 = vmatpush1.bf16.msra.mxu0 0
        %1470 = vmatprep.subr.bf16.mxu0 0
        %1471 = vmatpush1.bf16.msra.mxu0 0
        %1472 = vmatprep.subr.bf16.mxu0 0
        %1473 = vmatpush1.bf16.msra.mxu0 0
        %1474 = vmatprep.subr.bf16.mxu0 0
        %1475 = vmatpush1.bf16.msra.mxu0 0
        %1476 = vmatprep.subr.bf16.mxu0 0
        %1477 = vmatpush1.bf16.msra.mxu0 0
        %1478 = vmatprep.subr.bf16.mxu0 0
        %1479 = vmatpush1.bf16.msra.mxu0 0
        %1480 = vmatprep.subr.bf16.mxu0 0
        %1481 = vmatpush1.bf16.msra.mxu0 0
        %1482 = vmatprep.subr.bf16.mxu0 0
        %1483 = vmatpush1.bf16.msra.mxu0 0
        %1484 = vmatprep.subr.bf16.mxu0 0
        %1485 = vmatpush1.bf16.msra.mxu0 0
        %1486 = vmatprep.subr.bf16.mxu0 0
        %1487 = vmatpush1.bf16.msra.mxu0 0
        %1488 = vmatprep.subr.bf16.mxu0 0
        %1489 = vmatpush1.bf16.msra.mxu0 0
        %1490 = vmatprep.subr.bf16.mxu0 0
        %1491 = vmatpush1.bf16.msra.mxu0 0
        %1492 = vmatprep.subr.bf16.mxu0 0
        %1493 = vmatpush1.bf16.msra.mxu0 0
        %1494 = vmatprep.subr.bf16.mxu0 0
        %1495 = vmatpush1.bf16.msra.mxu0 0
        %1496 = vmatprep.mubr.bf16.mxu0 0
        %1497 = vmatmul.mubr.bf16.gmra.mrb[0].mxu0 %v1458
        %v1498 = vpop.f32.mrb[0].mxu0
        %v1499 = vadd.f32 0.0, %v1498
        %v1500 = vpop.f32.mrb[0].mxu0
        %v1501 = vpop.f32.mrb[0].mxu0
        %v1502 = vpop.f32.mrb[0].mxu0
        %1503 = vdwg.mxu0
        %1504 = vrot.lane.b32.xlu0 %v959, 64
        %v1505 = vpop.permute.xlu0 %1504
        %v1507 = vsel %vm969, %v1448, 0
        %v1510 = vsel %vm1460, %v1505, 0
        %1512 = vmatprep.subr.bf16.mxu0 0
        %1513 = vmatpush1.bf16.msra.mxu0 %v1510
        %1514 = vmatprep.subr.bf16.mxu0 0
        %1515 = vmatpush1.bf16.msra.mxu0 0
        %1516 = vmatprep.subr.bf16.mxu0 0
        %1517 = vmatpush1.bf16.msra.mxu0 0
        %1518 = vmatprep.subr.bf16.mxu0 0
        %1519 = vmatpush1.bf16.msra.mxu0 0
        %1520 = vmatprep.subr.bf16.mxu0 0
        %1521 = vmatpush1.bf16.msra.mxu0 0
        %1522 = vmatprep.subr.bf16.mxu0 0
        %1523 = vmatpush1.bf16.msra.mxu0 0
        %1524 = vmatprep.subr.bf16.mxu0 0
        %1525 = vmatpush1.bf16.msra.mxu0 0
        %1526 = vmatprep.subr.bf16.mxu0 0
        %1527 = vmatpush1.bf16.msra.mxu0 0
        %1528 = vmatprep.subr.bf16.mxu0 0
        %1529 = vmatpush1.bf16.msra.mxu0 0
        %1530 = vmatprep.subr.bf16.mxu0 0
        %1531 = vmatpush1.bf16.msra.mxu0 0
        %1532 = vmatprep.subr.bf16.mxu0 0
        %1533 = vmatpush1.bf16.msra.mxu0 0
        %1534 = vmatprep.subr.bf16.mxu0 0
        %1535 = vmatpush1.bf16.msra.mxu0 0
        %1536 = vmatprep.subr.bf16.mxu0 0
        %1537 = vmatpush1.bf16.msra.mxu0 0
        %1538 = vmatprep.subr.bf16.mxu0 0
        %1539 = vmatpush1.bf16.msra.mxu0 0
        %1540 = vmatprep.subr.bf16.mxu0 0
        %1541 = vmatpush1.bf16.msra.mxu0 0
        %1542 = vmatprep.subr.bf16.mxu0 0
        %1543 = vmatpush1.bf16.msra.mxu0 0
        %1544 = vmatprep.mubr.bf16.mxu0 0
        %1545 = vmatmul.mubr.bf16.gmra.mrb[0].mxu0 %v1507
        %v1546 = vpop.f32.mrb[0].mxu0
        %v1547 = vadd.f32 0.0, %v1546
        %v1548 = vpop.f32.mrb[0].mxu0
        %v1549 = vpop.f32.mrb[0].mxu0
        %v1550 = vpop.f32.mrb[0].mxu0
        %1551 = vdwg.mxu0
        %1552 = vrot.lane.b32.xlu0 %v960, 64
        %v1553 = vpop.permute.xlu0 %1552
        %v1555 = vsel %vm969, %v1449, 0
        %v1558 = vsel %vm1460, %v1553, 0
        %1560 = vmatprep.subr.bf16.mxu0 0
        %1561 = vmatpush1.bf16.msra.mxu0 %v1558
        %1562 = vmatprep.subr.bf16.mxu0 0
        %1563 = vmatpush1.bf16.msra.mxu0 0
        %1564 = vmatprep.subr.bf16.mxu0 0
        %1565 = vmatpush1.bf16.msra.mxu0 0
        %1566 = vmatprep.subr.bf16.mxu0 0
        %1567 = vmatpush1.bf16.msra.mxu0 0
        %1568 = vmatprep.subr.bf16.mxu0 0
        %1569 = vmatpush1.bf16.msra.mxu0 0
        %1570 = vmatprep.subr.bf16.mxu0 0
        %1571 = vmatpush1.bf16.msra.mxu0 0
        %1572 = vmatprep.subr.bf16.mxu0 0
        %1573 = vmatpush1.bf16.msra.mxu0 0
        %1574 = vmatprep.subr.bf16.mxu0 0
        %1575 = vmatpush1.bf16.msra.mxu0 0
        %1576 = vmatprep.subr.bf16.mxu0 0
        %1577 = vmatpush1.bf16.msra.mxu0 0
        %1578 = vmatprep.subr.bf16.mxu0 0
        %1579 = vmatpush1.bf16.msra.mxu0 0
        %1580 = vmatprep.subr.bf16.mxu0 0
        %1581 = vmatpush1.bf16.msra.mxu0 0
        %1582 = vmatprep.subr.bf16.mxu0 0
        %1583 = vmatpush1.bf16.msra.mxu0 0
        %1584 = vmatprep.subr.bf16.mxu0 0
        %1585 = vmatpush1.bf16.msra.mxu0 0
        %1586 = vmatprep.subr.bf16.mxu0 0
        %1587 = vmatpush1.bf16.msra.mxu0 0
        %1588 = vmatprep.subr.bf16.mxu0 0
        %1589 = vmatpush1.bf16.msra.mxu0 0
        %1590 = vmatprep.subr.bf16.mxu0 0
        %1591 = vmatpush1.bf16.msra.mxu0 0
        %1592 = vmatprep.mubr.bf16.mxu0 0
        %1593 = vmatmul.mubr.bf16.gmra.mrb[0].mxu0 %v1555
        %v1594 = vpop.f32.mrb[0].mxu0
        %v1595 = vadd.f32 0.0, %v1594
        %v1596 = vpop.f32.mrb[0].mxu0
        %v1597 = vpop.f32.mrb[0].mxu0
        %v1598 = vpop.f32.mrb[0].mxu0
        %1599 = vdwg.mxu0
        %1600 = vrot.lane.b32.xlu0 %v961, 64
        %v1601 = vpop.permute.xlu0 %1600
        %v1603 = vsel %vm969, %v1450, 0
        %v1606 = vsel %vm1460, %v1601, 0
        %1608 = vmatprep.subr.bf16.mxu0 0
        %1609 = vmatpush1.bf16.msra.mxu0 %v1606
        %1610 = vmatprep.subr.bf16.mxu0 0
        %1611 = vmatpush1.bf16.msra.mxu0 0
        %1612 = vmatprep.subr.bf16.mxu0 0
        %1613 = vmatpush1.bf16.msra.mxu0 0
        %1614 = vmatprep.subr.bf16.mxu0 0
        %1615 = vmatpush1.bf16.msra.mxu0 0
        %1616 = vmatprep.subr.bf16.mxu0 0
        %1617 = vmatpush1.bf16.msra.mxu0 0
        %1618 = vmatprep.subr.bf16.mxu0 0
        %1619 = vmatpush1.bf16.msra.mxu0 0
        %1620 = vmatprep.subr.bf16.mxu0 0
        %1621 = vmatpush1.bf16.msra.mxu0 0
        %1622 = vmatprep.subr.bf16.mxu0 0
        %1623 = vmatpush1.bf16.msra.mxu0 0
        %1624 = vmatprep.subr.bf16.mxu0 0
        %1625 = vmatpush1.bf16.msra.mxu0 0
        %1626 = vmatprep.subr.bf16.mxu0 0
        %1627 = vmatpush1.bf16.msra.mxu0 0
        %1628 = vmatprep.subr.bf16.mxu0 0
        %1629 = vmatpush1.bf16.msra.mxu0 0
        %1630 = vmatprep.subr.bf16.mxu0 0
        %1631 = vmatpush1.bf16.msra.mxu0 0
        %1632 = vmatprep.subr.bf16.mxu0 0
        %1633 = vmatpush1.bf16.msra.mxu0 0
        %1634 = vmatprep.subr.bf16.mxu0 0
        %1635 = vmatpush1.bf16.msra.mxu0 0
        %1636 = vmatprep.subr.bf16.mxu0 0
        %1637 = vmatpush1.bf16.msra.mxu0 0
        %1638 = vmatprep.subr.bf16.mxu0 0
        %1639 = vmatpush1.bf16.msra.mxu0 0
        %1640 = vmatprep.mubr.bf16.mxu0 0
        %1641 = vmatmul.mubr.bf16.gmra.mrb[0].mxu0 %v1603
        %v1642 = vpop.f32.mrb[0].mxu0
        %v1643 = vadd.f32 0.0, %v1642
        %v1644 = vpop.f32.mrb[0].mxu0
        %v1645 = vpop.f32.mrb[0].mxu0
        %v1646 = vpop.f32.mrb[0].mxu0
        %1647 = vdwg.mxu0
        %1648 = vrot.lane.b32.xlu0 %v962, 64
        %v1649 = vpop.permute.xlu0 %1648
        %v1651 = vsel %vm969, %v1451, 0
        %v1654 = vsel %vm1460, %v1649, 0
        %1656 = vmatprep.subr.bf16.mxu0 0
        %1657 = vmatpush1.bf16.msra.mxu0 %v1654
        %1658 = vmatprep.subr.bf16.mxu0 0
        %1659 = vmatpush1.bf16.msra.mxu0 0
        %1660 = vmatprep.subr.bf16.mxu0 0
        %1661 = vmatpush1.bf16.msra.mxu0 0
        %1662 = vmatprep.subr.bf16.mxu0 0
        %1663 = vmatpush1.bf16.msra.mxu0 0
        %1664 = vmatprep.subr.bf16.mxu0 0
        %1665 = vmatpush1.bf16.msra.mxu0 0
        %1666 = vmatprep.subr.bf16.mxu0 0
        %1667 = vmatpush1.bf16.msra.mxu0 0
        %1668 = vmatprep.subr.bf16.mxu0 0
        %1669 = vmatpush1.bf16.msra.mxu0 0
        %1670 = vmatprep.subr.bf16.mxu0 0
        %1671 = vmatpush1.bf16.msra.mxu0 0
        %1672 = vmatprep.subr.bf16.mxu0 0
        %1673 = vmatpush1.bf16.msra.mxu0 0
        %1674 = vmatprep.subr.bf16.mxu0 0
        %1675 = vmatpush1.bf16.msra.mxu0 0
        %1676 = vmatprep.subr.bf16.mxu0 0
        %1677 = vmatpush1.bf16.msra.mxu0 0
        %1678 = vmatprep.subr.bf16.mxu0 0
        %1679 = vmatpush1.bf16.msra.mxu0 0
        %1680 = vmatprep.subr.bf16.mxu0 0
        %1681 = vmatpush1.bf16.msra.mxu0 0
        %1682 = vmatprep.subr.bf16.mxu0 0
        %1683 = vmatpush1.bf16.msra.mxu0 0
        %1684 = vmatprep.subr.bf16.mxu0 0
        %1685 = vmatpush1.bf16.msra.mxu0 0
        %1686 = vmatprep.subr.bf16.mxu0 0
        %1687 = vmatpush1.bf16.msra.mxu0 0
        %1688 = vmatprep.mubr.bf16.mxu0 0
        %1689 = vmatmul.mubr.bf16.gmra.mrb[0].mxu0 %v1651
        %v1690 = vpop.f32.mrb[0].mxu0
        %v1691 = vadd.f32 0.0, %v1690
        %v1692 = vpop.f32.mrb[0].mxu0
        %v1693 = vpop.f32.mrb[0].mxu0
        %v1694 = vpop.f32.mrb[0].mxu0
        %1695 = vdwg.mxu0
        %1696 = vrot.lane.b32.xlu0 %v963, 64
        %v1697 = vpop.permute.xlu0 %1696
        %v1699 = vsel %vm969, %v1452, 0
        %v1702 = vsel %vm1460, %v1697, 0
        %1704 = vmatprep.subr.bf16.mxu0 0
        %1705 = vmatpush1.bf16.msra.mxu0 %v1702
        %1706 = vmatprep.subr.bf16.mxu0 0
        %1707 = vmatpush1.bf16.msra.mxu0 0
        %1708 = vmatprep.subr.bf16.mxu0 0
        %1709 = vmatpush1.bf16.msra.mxu0 0
        %1710 = vmatprep.subr.bf16.mxu0 0
        %1711 = vmatpush1.bf16.msra.mxu0 0
        %1712 = vmatprep.subr.bf16.mxu0 0
        %1713 = vmatpush1.bf16.msra.mxu0 0
        %1714 = vmatprep.subr.bf16.mxu0 0
        %1715 = vmatpush1.bf16.msra.mxu0 0
        %1716 = vmatprep.subr.bf16.mxu0 0
        %1717 = vmatpush1.bf16.msra.mxu0 0
        %1718 = vmatprep.subr.bf16.mxu0 0
        %1719 = vmatpush1.bf16.msra.mxu0 0
        %1720 = vmatprep.subr.bf16.mxu0 0
        %1721 = vmatpush1.bf16.msra.mxu0 0
        %1722 = vmatprep.subr.bf16.mxu0 0
        %1723 = vmatpush1.bf16.msra.mxu0 0
        %1724 = vmatprep.subr.bf16.mxu0 0
        %1725 = vmatpush1.bf16.msra.mxu0 0
        %1726 = vmatprep.subr.bf16.mxu0 0
        %1727 = vmatpush1.bf16.msra.mxu0 0
        %1728 = vmatprep.subr.bf16.mxu0 0
        %1729 = vmatpush1.bf16.msra.mxu0 0
        %1730 = vmatprep.subr.bf16.mxu0 0
        %1731 = vmatpush1.bf16.msra.mxu0 0
        %1732 = vmatprep.subr.bf16.mxu0 0
        %1733 = vmatpush1.bf16.msra.mxu0 0
        %1734 = vmatprep.subr.bf16.mxu0 0
        %1735 = vmatpush1.bf16.msra.mxu0 0
        %1736 = vmatprep.mubr.bf16.mxu0 0
        %1737 = vmatmul.mubr.bf16.gmra.mrb[0].mxu0 %v1699
        %v1738 = vpop.f32.mrb[0].mxu0
        %v1739 = vadd.f32 0.0, %v1738
        %v1740 = vpop.f32.mrb[0].mxu0
        %v1741 = vpop.f32.mrb[0].mxu0
        %v1742 = vpop.f32.mrb[0].mxu0
        %1743 = vdwg.mxu0
        %1744 = vrot.lane.b32.xlu0 %v964, 64
        %v1745 = vpop.permute.xlu0 %1744
        %v1747 = vsel %vm969, %v1453, 0
        %v1750 = vsel %vm1460, %v1745, 0
        %1752 = vmatprep.subr.bf16.mxu0 0
        %1753 = vmatpush1.bf16.msra.mxu0 %v1750
        %1754 = vmatprep.subr.bf16.mxu0 0
        %1755 = vmatpush1.bf16.msra.mxu0 0
        %1756 = vmatprep.subr.bf16.mxu0 0
        %1757 = vmatpush1.bf16.msra.mxu0 0
        %1758 = vmatprep.subr.bf16.mxu0 0
        %1759 = vmatpush1.bf16.msra.mxu0 0
        %1760 = vmatprep.subr.bf16.mxu0 0
        %1761 = vmatpush1.bf16.msra.mxu0 0
        %1762 = vmatprep.subr.bf16.mxu0 0
        %1763 = vmatpush1.bf16.msra.mxu0 0
        %1764 = vmatprep.subr.bf16.mxu0 0
        %1765 = vmatpush1.bf16.msra.mxu0 0
        %1766 = vmatprep.subr.bf16.mxu0 0
        %1767 = vmatpush1.bf16.msra.mxu0 0
        %1768 = vmatprep.subr.bf16.mxu0 0
        %1769 = vmatpush1.bf16.msra.mxu0 0
        %1770 = vmatprep.subr.bf16.mxu0 0
        %1771 = vmatpush1.bf16.msra.mxu0 0
        %1772 = vmatprep.subr.bf16.mxu0 0
        %1773 = vmatpush1.bf16.msra.mxu0 0
        %1774 = vmatprep.subr.bf16.mxu0 0
        %1775 = vmatpush1.bf16.msra.mxu0 0
        %1776 = vmatprep.subr.bf16.mxu0 0
        %1777 = vmatpush1.bf16.msra.mxu0 0
        %1778 = vmatprep.subr.bf16.mxu0 0
        %1779 = vmatpush1.bf16.msra.mxu0 0
        %1780 = vmatprep.subr.bf16.mxu0 0
        %1781 = vmatpush1.bf16.msra.mxu0 0
        %1782 = vmatprep.subr.bf16.mxu0 0
        %1783 = vmatpush1.bf16.msra.mxu0 0
        %1784 = vmatprep.mubr.bf16.mxu0 0
        %1785 = vmatmul.mubr.bf16.gmra.mrb[0].mxu0 %v1747
        %v1786 = vpop.f32.mrb[0].mxu0
        %v1787 = vadd.f32 0.0, %v1786
        %v1788 = vpop.f32.mrb[0].mxu0
        %v1789 = vpop.f32.mrb[0].mxu0
        %v1790 = vpop.f32.mrb[0].mxu0
        %1791 = vdwg.mxu0
        %1792 = vrot.lane.b32.xlu0 %v965, 64
        %v1793 = vpop.permute.xlu0 %1792
        %v1795 = vsel %vm969, %v1454, 0
        %v1798 = vsel %vm1460, %v1793, 0
        %1800 = vmatprep.subr.bf16.mxu0 0
        %1801 = vmatpush1.bf16.msra.mxu0 %v1798
        %1802 = vmatprep.subr.bf16.mxu0 0
        %1803 = vmatpush1.bf16.msra.mxu0 0
        %1804 = vmatprep.subr.bf16.mxu0 0
        %1805 = vmatpush1.bf16.msra.mxu0 0
        %1806 = vmatprep.subr.bf16.mxu0 0
        %1807 = vmatpush1.bf16.msra.mxu0 0
        %1808 = vmatprep.subr.bf16.mxu0 0
        %1809 = vmatpush1.bf16.msra.mxu0 0
        %1810 = vmatprep.subr.bf16.mxu0 0
        %1811 = vmatpush1.bf16.msra.mxu0 0
        %1812 = vmatprep.subr.bf16.mxu0 0
        %1813 = vmatpush1.bf16.msra.mxu0 0
        %1814 = vmatprep.subr.bf16.mxu0 0
        %1815 = vmatpush1.bf16.msra.mxu0 0
        %1816 = vmatprep.subr.bf16.mxu0 0
        %1817 = vmatpush1.bf16.msra.mxu0 0
        %1818 = vmatprep.subr.bf16.mxu0 0
        %1819 = vmatpush1.bf16.msra.mxu0 0
        %1820 = vmatprep.subr.bf16.mxu0 0
        %1821 = vmatpush1.bf16.msra.mxu0 0
        %1822 = vmatprep.subr.bf16.mxu0 0
        %1823 = vmatpush1.bf16.msra.mxu0 0
        %1824 = vmatprep.subr.bf16.mxu0 0
        %1825 = vmatpush1.bf16.msra.mxu0 0
        %1826 = vmatprep.subr.bf16.mxu0 0
        %1827 = vmatpush1.bf16.msra.mxu0 0
        %1828 = vmatprep.subr.bf16.mxu0 0
        %1829 = vmatpush1.bf16.msra.mxu0 0
        %1830 = vmatprep.subr.bf16.mxu0 0
        %1831 = vmatpush1.bf16.msra.mxu0 0
        %1832 = vmatprep.mubr.bf16.mxu0 0
        %1833 = vmatmul.mubr.bf16.gmra.mrb[0].mxu0 %v1795
        %v1834 = vpop.f32.mrb[0].mxu0
        %v1835 = vadd.f32 0.0, %v1834
        %v1836 = vpop.f32.mrb[0].mxu0
        %v1837 = vpop.f32.mrb[0].mxu0
        %v1838 = vpop.f32.mrb[0].mxu0
        %1839 = vdwg.mxu0
        %1842 = vrot.lane.b32.xlu0 %v1595, 8
        %v1843 = vpop.permute.xlu0 %1842
        %1844 = vrot.lane.b32.xlu0 %v1643, 8
        %v1845 = vpop.permute.xlu0 %1844
        %1850 = vrot.lane.b32.xlu0 %v1691, 16
        %v1851 = vpop.permute.xlu0 %1850
        %1852 = vrot.lane.b32.xlu0 %v1739, 16
        %v1853 = vpop.permute.xlu0 %1852
        %1858 = vrot.lane.b32.xlu0 %v1787, 24
        %v1859 = vpop.permute.xlu0 %1858
        %1860 = vrot.lane.b32.xlu0 %v1835, 24
        %v1861 = vpop.permute.xlu0 %1860
        %v1864 = vsel %vm969, %v1499, %v1843
        %v1865 = vsel %vm969, %v1547, %v1845
        %vm1866 = vcmask 130048
        %v1867 = vsel %vm1866, %v1864, %v1851
        %v1868 = vsel %vm1866, %v1865, %v1853
        %vm1869 = vcmask 195584
        %v1870 = vsel %vm1869, %v1867, %v1859
        %v1871 = vsel %vm1869, %v1868, %v1861
        %v1872 = vpack.c.bf16 %v1871, %v1870
        %v1873 = vld [vmem:[%s794] sm:$0xf]
        %v1874 = vld [vmem:[%s794 + $0x4] sm:$0xf]
        %v1875 = vld [vmem:[%s794 + $0x8] sm:$0xf]
        %v1876 = vld [vmem:[%s794 + $0xc] sm:$0xf]
        %v1877 = vld [vmem:[%s660] sm:$0x1]
        %v1879 = vlaneseq
        %v1880 = vshrl.u32 %v1879, 7
        %v1881 = vsub.s32 0, %v1880
        %v1882 = vrot.slane %v1877, %v1881
        %v1888 = vunpack.c.l.b16 %v1873
        %v1889 = vunpack.c.l.b16 %v1874
        %v1890 = vunpack.c.l.b16 %v1875
        %v1891 = vunpack.c.l.b16 %v1876
        %v1892 = vpack.c.b16 %v1889, %v1888
        %v1893 = vpack.c.b16 %v1891, %v1890
        %v1897 = vsel %vm826, %v1872, 0
        %1899 = vmatprep.subr.bf16.mxu0 0
        %1900 = vmatpush1.bf16.msra.mxu0 %v1892
        %1901 = vmatprep.subr.bf16.mxu0 0
        %1902 = vmatpush1.bf16.msra.mxu0 %v1893
        %1903 = vmatprep.subr.bf16.mxu0 0
        %1904 = vmatpush1.bf16.msra.mxu0 0
        %1905 = vmatprep.subr.bf16.mxu0 0
        %1906 = vmatpush1.bf16.msra.mxu0 0
        %1907 = vmatprep.subr.bf16.mxu0 0
        %1908 = vmatpush1.bf16.msra.mxu0 0
        %1909 = vmatprep.subr.bf16.mxu0 0
        %1910 = vmatpush1.bf16.msra.mxu0 0
        %1911 = vmatprep.subr.bf16.mxu0 0
        %1912 = vmatpush1.bf16.msra.mxu0 0
        %1913 = vmatprep.subr.bf16.mxu0 0
        %1914 = vmatpush1.bf16.msra.mxu0 0
        %1915 = vmatprep.subr.bf16.mxu0 0
        %1916 = vmatpush1.bf16.msra.mxu0 0
        %1917 = vmatprep.subr.bf16.mxu0 0
        %1918 = vmatpush1.bf16.msra.mxu0 0
        %1919 = vmatprep.subr.bf16.mxu0 0
        %1920 = vmatpush1.bf16.msra.mxu0 0
        %1921 = vmatprep.subr.bf16.mxu0 0
        %1922 = vmatpush1.bf16.msra.mxu0 0
        %1923 = vmatprep.subr.bf16.mxu0 0
        %1924 = vmatpush1.bf16.msra.mxu0 0
        %1925 = vmatprep.subr.bf16.mxu0 0
        %1926 = vmatpush1.bf16.msra.mxu0 0
        %1927 = vmatprep.subr.bf16.mxu0 0
        %1928 = vmatpush1.bf16.msra.mxu0 0
        %1929 = vmatprep.subr.bf16.mxu0 0
        %1930 = vmatpush1.bf16.msra.mxu0 0
        %1931 = vmatprep.mubr.bf16.mxu0 0
        %1932 = vmatmul.mubr.bf16.gmra.mrb[0].mxu0 %v1897
        %v1933 = vpop.f32.mrb[0].mxu0
        %v1934 = vadd.f32 %v1882, %v1933
        %v1935 = vpop.f32.mrb[0].mxu0
        %v1936 = vpop.f32.mrb[0].mxu0
        %v1937 = vadd.f32 %v1882, %v1936
        %v1938 = vpop.f32.mrb[0].mxu0
        %1939 = vdwg.mxu0
        %v1940 = vadd.f32 %v822, %v1934
        %v1941 = vadd.f32 %v823, %v1937
        %v1942 = vld [vmem:[%s797] sm:$0x1]
        %v1943 = vld [vmem:[%s668] sm:$0x1]
        %v1944 = vsel %vm826, %v1940, 0.0
        %1945 = vadd.xlane.f32.xlu0 %v1944
        %v1946 = vpop.xlane.xlu0 %1945
        %v1947 = vsel %vm826, %v1941, 0.0
        %1948 = vadd.xlane.f32.xlu0 %v1947
        %v1949 = vpop.xlane.xlu0 %1948
        %v1950 = vmul.f32 %v1946, %v833
        %v1951 = vmul.f32 %v1949, %v833
        %v1952 = vsub.f32 %v1940, %v1950
        %v1953 = vsub.f32 %v1941, %v1951
        %v1954 = vmul.f32 %v1952, %v1952
        %v1955 = vmul.f32 %v1953, %v1953
        %v1956 = vsel %vm826, %v1954, 0.0
        %1957 = vadd.xlane.f32.xlu0 %v1956
        %v1958 = vpop.xlane.xlu0 %1957
        %v1959 = vsel %vm826, %v1955, 0.0
        %1960 = vadd.xlane.f32.xlu0 %v1959
        %v1961 = vpop.xlane.xlu0 %1960
        %v1962 = vmul.f32 %v1958, %v833
        %v1963 = vmul.f32 %v1961, %v833
        %v1964 = vadd.f32 %v1962, 1e-06
        %v1965 = vadd.f32 %v1963, 1e-06
        %v1966 = vrsqrt.pop %v1964
        %v1967 = vrsqrt.pop %v1965
        %v1968 = vmul.f32 %v1952, %v1966
        %v1969 = vmul.f32 %v1953, %v1967
        %v1971 = vlaneseq
        %v1972 = vshrl.u32 %v1971, 7
        %v1973 = vsub.s32 0, %v1972
        %v1974 = vrot.slane %v1942, %v1973
        %v1976 = vmul.f32 %v1968, %v1974
        %v1977 = vmul.f32 %v1969, %v1974
        %v1979 = vlaneseq
        %v1980 = vshrl.u32 %v1979, 7
        %v1981 = vsub.s32 0, %v1980
        %v1982 = vrot.slane %v1943, %v1981
        %v1984 = vadd.f32 %v1976, %v1982
        %v1985 = vadd.f32 %v1977, %v1982
        %v1986 = vpack.c.bf16 %v1985, %v1984
        %v1987 = vld [vmem:[%s802] sm:$0xf]
        %v1988 = vld [vmem:[%s802 + $0x4] sm:$0xf]
        %v1989 = vld [vmem:[%s802 + $0x8] sm:$0xf]
        %v1990 = vld [vmem:[%s802 + $0xc] sm:$0xf]
        %v1991 = vld [vmem:[%s676] sm:$0x1]
        %v1993 = vlaneseq
        %v1994 = vshrl.u32 %v1993, 7
        %v1995 = vsub.s32 0, %v1994
        %v1996 = vrot.slane %v1991, %v1995
        %v2002 = vunpack.c.l.b16 %v1987
        %v2003 = vunpack.c.l.b16 %v1988
        %v2004 = vunpack.c.l.b16 %v1989
        %v2005 = vunpack.c.l.b16 %v1990
        %v2006 = vpack.c.b16 %v2003, %v2002
        %v2007 = vpack.c.b16 %v2005, %v2004
        %v2011 = vsel %vm826, %v1986, 0
        %2013 = vmatprep.subr.bf16.mxu0 0
        %2014 = vmatpush1.bf16.msra.mxu0 %v2006
        %2015 = vmatprep.subr.bf16.mxu0 0
        %2016 = vmatpush1.bf16.msra.mxu0 %v2007
        %2017 = vmatprep.subr.bf16.mxu0 0
        %2018 = vmatpush1.bf16.msra.mxu0 0
        %2019 = vmatprep.subr.bf16.mxu0 0
        %2020 = vmatpush1.bf16.msra.mxu0 0
        %2021 = vmatprep.subr.bf16.mxu0 0
        %2022 = vmatpush1.bf16.msra.mxu0 0
        %2023 = vmatprep.subr.bf16.mxu0 0
        %2024 = vmatpush1.bf16.msra.mxu0 0
        %2025 = vmatprep.subr.bf16.mxu0 0
        %2026 = vmatpush1.bf16.msra.mxu0 0
        %2027 = vmatprep.subr.bf16.mxu0 0
        %2028 = vmatpush1.bf16.msra.mxu0 0
        %2029 = vmatprep.subr.bf16.mxu0 0
        %2030 = vmatpush1.bf16.msra.mxu0 0
        %2031 = vmatprep.subr.bf16.mxu0 0
        %2032 = vmatpush1.bf16.msra.mxu0 0
        %2033 = vmatprep.subr.bf16.mxu0 0
        %2034 = vmatpush1.bf16.msra.mxu0 0
        %2035 = vmatprep.subr.bf16.mxu0 0
        %2036 = vmatpush1.bf16.msra.mxu0 0
        %2037 = vmatprep.subr.bf16.mxu0 0
        %2038 = vmatpush1.bf16.msra.mxu0 0
        %2039 = vmatprep.subr.bf16.mxu0 0
        %2040 = vmatpush1.bf16.msra.mxu0 0
        %2041 = vmatprep.subr.bf16.mxu0 0
        %2042 = vmatpush1.bf16.msra.mxu0 0
        %2043 = vmatprep.subr.bf16.mxu0 0
        %2044 = vmatpush1.bf16.msra.mxu0 0
        %2045 = vmatprep.mubr.bf16.mxu0 0
        %2046 = vmatmul.mubr.bf16.gmra.mrb[0].mxu0 %v2011
        %v2047 = vpop.f32.mrb[0].mxu0
        %v2048 = vadd.f32 %v1996, %v2047
        %v2049 = vpop.f32.mrb[0].mxu0
        %v2050 = vpop.f32.mrb[0].mxu0
        %v2051 = vadd.f32 %v1996, %v2050
        %v2052 = vpop.f32.mrb[0].mxu0
        %2053 = vdwg.mxu0
        %v2054 = vmul.f32 %v2048, 0.5
        %v2055 = vmul.f32 %v2051, 0.5
        %v2056 = vmul.f32 %v2048, 0.70710677
        %v2057 = vmul.f32 %v2051, 0.70710677
        %vm2058 = vcmp.ge.f32.partialorder %v2056, 0.0
        %vm2059 = vcmp.ge.f32.partialorder %v2057, 0.0
        %v2060 = vsel %vm2058, 1.0, -1.0
        %v2061 = vsel %vm2059, 1.0, -1.0
        %v2062 = vand.u32 2147483647, %v2056
        %v2063 = vand.u32 2147483647, %v2057
        %v2064 = vmul.f32 %v2062, 0.3275911
        %v2065 = vmul.f32 %v2063, 0.3275911
        %v2066 = vadd.f32 %v2064, 1.0
        %v2067 = vadd.f32 %v2065, 1.0
        %v2068 = vrcp.pop %v2066
        %v2069 = vrcp.pop %v2067
        %v2070 = vmul.f32 %v2068, 1.0614054
        %v2071 = vmul.f32 %v2069, 1.0614054
        %v2072 = vadd.f32 %v2070, -1.4531521
        %v2073 = vadd.f32 %v2071, -1.4531521
        %v2074 = vmul.f32 %v2072, %v2068
        %v2075 = vmul.f32 %v2073, %v2069
        %v2076 = vadd.f32 %v2074, 1.4214138
        %v2077 = vadd.f32 %v2075, 1.4214138
        %v2078 = vmul.f32 %v2076, %v2068
        %v2079 = vmul.f32 %v2077, %v2069
        %v2080 = vadd.f32 %v2078, -0.28449672
        %v2081 = vadd.f32 %v2079, -0.28449672
        %v2082 = vmul.f32 %v2080, %v2068
        %v2083 = vmul.f32 %v2081, %v2069
        %v2084 = vadd.f32 %v2082, 0.2548296
        %v2085 = vadd.f32 %v2083, 0.2548296
        %v2086 = vmul.f32 %v2084, %v2068
        %v2087 = vmul.f32 %v2085, %v2069
        %v2088 = vsub.f32 0.0, %v2062
        %v2089 = vsub.f32 0.0, %v2063
        %v2090 = vmul.f32 %v2088, %v2062
        %v2091 = vmul.f32 %v2089, %v2063
        %v2092 = vmul.f32 %v2090, 1.442695
        %v2093 = vpow.pop %v2092
        %v2094 = vmul.f32 %v2091, 1.442695
        %v2095 = vpow.pop %v2094
        %v2096 = vmul.f32 %v2086, %v2093
        %v2097 = vmul.f32 %v2087, %v2095
        %v2098 = vsub.f32 1.0, %v2096
        %v2099 = vsub.f32 1.0, %v2097
        %v2100 = vmul.f32 %v2060, %v2098
        %v2101 = vmul.f32 %v2061, %v2099
        %v2102 = vadd.f32 %v2100, 1.0
        %v2103 = vadd.f32 %v2101, 1.0
        %v2104 = vmul.f32 %v2054, %v2102
        %v2105 = vmul.f32 %v2055, %v2103
        %v2106 = vpack.c.bf16 %v2105, %v2104
        %v2107 = vld [vmem:[%s807] sm:$0xf]
        %v2108 = vld [vmem:[%s807 + $0x4] sm:$0xf]
        %v2109 = vld [vmem:[%s807 + $0x8] sm:$0xf]
        %v2110 = vld [vmem:[%s807 + $0xc] sm:$0xf]
        %v2111 = vld [vmem:[%s807 + $0x10] sm:$0xf]
        %v2112 = vld [vmem:[%s807 + $0x14] sm:$0xf]
        %v2113 = vld [vmem:[%s807 + $0x18] sm:$0xf]
        %v2114 = vld [vmem:[%s807 + $0x1c] sm:$0xf]
        %v2115 = vld [vmem:[%s684] sm:$0x1]
        %v2117 = vlaneseq
        %v2118 = vshrl.u32 %v2117, 7
        %v2119 = vsub.s32 0, %v2118
        %v2120 = vrot.slane %v2115, %v2119
        %v2130 = vunpack.c.l.b16 %v2107
        %v2131 = vunpack.c.l.b16 %v2108
        %v2132 = vunpack.c.l.b16 %v2109
        %v2133 = vunpack.c.l.b16 %v2110
        %v2134 = vunpack.c.l.b16 %v2111
        %v2135 = vunpack.c.l.b16 %v2112
        %v2136 = vunpack.c.l.b16 %v2113
        %v2137 = vunpack.c.l.b16 %v2114
        %v2138 = vpack.c.b16 %v2131, %v2130
        %v2139 = vpack.c.b16 %v2133, %v2132
        %v2140 = vpack.c.b16 %v2135, %v2134
        %v2141 = vpack.c.b16 %v2137, %v2136
        %vm2146 = vcmask 523264
        %v2148 = vsel %vm2146, %v2106, 0
        %2150 = vmatprep.subr.bf16.mxu0 0
        %2151 = vmatpush1.bf16.msra.mxu0 %v2138
        %2152 = vmatprep.subr.bf16.mxu0 0
        %2153 = vmatpush1.bf16.msra.mxu0 %v2139
        %2154 = vmatprep.subr.bf16.mxu0 0
        %2155 = vmatpush1.bf16.msra.mxu0 %v2140
        %2156 = vmatprep.subr.bf16.mxu0 0
        %2157 = vmatpush1.bf16.msra.mxu0 %v2141
        %2158 = vmatprep.subr.bf16.mxu0 0
        %2159 = vmatpush1.bf16.msra.mxu0 0
        %2160 = vmatprep.subr.bf16.mxu0 0
        %2161 = vmatpush1.bf16.msra.mxu0 0
        %2162 = vmatprep.subr.bf16.mxu0 0
        %2163 = vmatpush1.bf16.msra.mxu0 0
        %2164 = vmatprep.subr.bf16.mxu0 0
        %2165 = vmatpush1.bf16.msra.mxu0 0
        %2166 = vmatprep.subr.bf16.mxu0 0
        %2167 = vmatpush1.bf16.msra.mxu0 0
        %2168 = vmatprep.subr.bf16.mxu0 0
        %2169 = vmatpush1.bf16.msra.mxu0 0
        %2170 = vmatprep.subr.bf16.mxu0 0
        %2171 = vmatpush1.bf16.msra.mxu0 0
        %2172 = vmatprep.subr.bf16.mxu0 0
        %2173 = vmatpush1.bf16.msra.mxu0 0
        %2174 = vmatprep.subr.bf16.mxu0 0
        %2175 = vmatpush1.bf16.msra.mxu0 0
        %2176 = vmatprep.subr.bf16.mxu0 0
        %2177 = vmatpush1.bf16.msra.mxu0 0
        %2178 = vmatprep.subr.bf16.mxu0 0
        %2179 = vmatpush1.bf16.msra.mxu0 0
        %2180 = vmatprep.subr.bf16.mxu0 0
        %2181 = vmatpush1.bf16.msra.mxu0 0
        %2182 = vmatprep.mubr.bf16.mxu0 0
        %2183 = vmatmul.mubr.bf16.gmra.mrb[0].mxu0 %v2148
        %v2184 = vpop.f32.mrb[0].mxu0
        %v2185 = vadd.f32 %v2120, %v2184
        %v2186 = vpop.f32.mrb[0].mxu0
        %v2187 = vpop.f32.mrb[0].mxu0
        %v2188 = vadd.f32 %v2120, %v2187
        %v2189 = vpop.f32.mrb[0].mxu0
        %2190 = vdwg.mxu0
        %v2191 = vadd.f32 %v1940, %v2185
        %v2192 = vadd.f32 %v1941, %v2188
        %p2193 = scmp.lt.s32.totalorder %s41, 1
        // Predicated region
        $region113: #{encoder_forward.1} parent=83 // pred_check
          %p2194 = pneg %p2193
        $region114: #{encoder_forward.1} parent=83 // pred_check_branch
          %2196 = sbr.rel (%p2194) target = $region116
        $region115: #{encoder_forward.1} parent=83 // pred_region
          %2197 = vst.msk [vmem:[#allocation13] sm:$0xff] %vm826, %v2191
          %2198 = vst.msk [vmem:[#allocation13 + $0x8] sm:$0xff] %vm826, %v2192
        $region116: #{encoder_forward.1} parent=83 // pred_fallthru
          _
        %p2199 = scmp.eq.s32.totalorder %s41, 1
        // Predicated region
        $region117: #{encoder_forward.1} parent=83 // pred_check
          %p2200 = pneg %p2199
        $region118: #{encoder_forward.1} parent=83 // pred_check_branch
          %2202 = sbr.rel (%p2200) target = $region120
        $region119: #{encoder_forward.1} parent=83 // pred_region
          %v2203 = vld [vmem:[%s14] sm:$0x1]
          %v2204 = vld [vmem:[#allocation11] sm:$0x1]
          %v2205 = vsel %vm826, %v2191, 0.0
          %2206 = vadd.xlane.f32.xlu0 %v2205
          %v2207 = vpop.xlane.xlu0 %2206
          %v2208 = vsel %vm826, %v2192, 0.0
          %2209 = vadd.xlane.f32.xlu0 %v2208
          %v2210 = vpop.xlane.xlu0 %2209
          %v2211 = vmul.f32 %v2207, %v833
          %v2212 = vmul.f32 %v2210, %v833
          %v2213 = vsub.f32 %v2191, %v2211
          %v2214 = vsub.f32 %v2192, %v2212
          %v2215 = vmul.f32 %v2213, %v2213
          %v2216 = vmul.f32 %v2214, %v2214
          %v2217 = vsel %vm826, %v2215, 0.0
          %2218 = vadd.xlane.f32.xlu0 %v2217
          %v2219 = vpop.xlane.xlu0 %2218
          %v2220 = vsel %vm826, %v2216, 0.0
          %2221 = vadd.xlane.f32.xlu0 %v2220
          %v2222 = vpop.xlane.xlu0 %2221
          %v2223 = vmul.f32 %v2219, %v833
          %v2224 = vmul.f32 %v2222, %v833
          %v2225 = vadd.f32 %v2223, 1e-06
          %v2226 = vadd.f32 %v2224, 1e-06
          %v2227 = vrsqrt.pop %v2225
          %v2228 = vrsqrt.pop %v2226
          %v2229 = vmul.f32 %v2213, %v2227
          %v2230 = vmul.f32 %v2214, %v2228
          %v2232 = vlaneseq
          %v2233 = vshrl.u32 %v2232, 7
          %v2234 = vsub.s32 0, %v2233
          %v2235 = vrot.slane %v2203, %v2234
          %v2237 = vmul.f32 %v2229, %v2235
          %v2238 = vmul.f32 %v2230, %v2235
          %v2240 = vlaneseq
          %v2241 = vshrl.u32 %v2240, 7
          %v2242 = vsub.s32 0, %v2241
          %v2243 = vrot.slane %v2204, %v2242
          %v2245 = vadd.f32 %v2237, %v2243
          %v2246 = vadd.f32 %v2238, %v2243
          %2247 = vst.msk [vmem:[#allocation13] sm:$0xff] %vm826, %v2245
          %2248 = vst.msk [vmem:[#allocation13 + $0x8] sm:$0xff] %vm826, %v2246
        $region120: #{encoder_forward.1} parent=83 // pred_fallthru
          _
        // Predicated region
        $region121: #{encoder_forward.1} parent=83 // pred_check
          %p2249 = pneg %p467
        $region122: #{encoder_forward.1} parent=83 // pred_check_branch
          %2251 = sbr.rel (%p2249) target = $region124
        $region123: #{encoder_forward.1} parent=83 // pred_region
          %s2252 = smul.u32 2, %s40
          %s2254 = ssub.s32 256, 256
          %2255 = vsyncadd [#allocation4], %s2254
          %s2256 = smul.addr %s2252, 128
          %s2257 = scalar_lea.hbm %s16, %s2256
          %s2258 = sshll.u32 [#allocation13], 4
          %s2259 = int_to_ptr.vmem [resolvable:$true] %s2258
          %2264 = dma.vmem_to_hbm [thread:$0]  %s2259, 256, %s2257, [#allocation4], 128, 128, 8
        $region124: #{encoder_forward.1} parent=83 // pred_fallthru
          _
        // Predicated region
        $region125: #{encoder_forward.1} parent=83 // pred_check
          %p2265 = pneg %p467
        $region126: #{encoder_forward.1} parent=83 // pred_check_branch
          %2267 = sbr.rel (%p2265) target = $region128
        $region127: #{encoder_forward.1} parent=83 // pred_region
          %2268 = dma.done [#allocation4], 256
        $region128: #{encoder_forward.1} parent=83 // pred_fallthru
          _
      $region84: #{encoder_forward.1} parent=5 // pred_fallthru
        _
      %p2269 = scmp.le.s32.totalorder 2, %s31
      // Predicated region
      $region129: #{encoder_forward.1} parent=5 // pred_check
        %p2270 = pneg %p2269
      $region130: #{encoder_forward.1} parent=5 // pred_check_branch
        %2272 = sbr.rel (%p2270) target = $region132
      $region131: #{encoder_forward.1} parent=5 // pred_region
        %s2273 = ssub.s32 %s31, 2
      $region132: #{encoder_forward.1} parent=5 // pred_fallthru
        _
    $region6: #{encoder_forward.1} parent=1 // loop_footer
      %s35 = sadd.s32 1, %s31
    $region7: #{encoder_forward.1} parent=1 // loop_footer_branch
      %30 = sbr.rel target = $region3
    $region8: #{encoder_forward.1} parent=1 // loop_exit
      _
    %2274 = vsyncpa [#allocation3], 1
    %s2275 = scalar_lea.sflag [#allocation3], 1
    %2276 = vsyncpa %s2275, 1
    %2277 = vsyncpa [#allocation6], 1
    %s2278 = scalar_lea.sflag [#allocation6], 1
    %2279 = vsyncpa %s2278, 1
    %2280 = vsyncpa [#allocation9], 1
    %s2281 = scalar_lea.sflag [#allocation9], 1
    %2282 = vsyncpa %s2281, 1
    %2283 = vsyncpa [#allocation12], 1
    %2284 = vsyncpa [#allocation4], 1
    %s2285 = scalar_lea.sflag [#allocation4], 1
    %2286 = vsyncpa %s2285, 1

</llo_original>
